<compile_context>
chip_gen: v7x
topology: tpu7x:2x2x1
jax: 0.10.0
libtpu: 0.0.40
codegen_flags: <defaults>
</compile_context>

<pallas_src>
import math
import jax
import jax.numpy as jnp
from jax.experimental import pallas as pl


LANE_PAD = 128   # lane-dense output slab width


# ----------------------------- fused kernel ----------------------------------

def fused_actor_critic_kernel(
        a_ref, x_ref, act_ref, var_ref,
        gw1_ref, gb1_ref, gw2_ref, gb2_ref,
        aw1_ref, ab1_ref, cw1_ref, cb1_ref,
        aw2_ref, ab2_ref, cw2_ref, cb2_ref,
        aw3p_ref, ab3p_ref, cw3r_ref, cb3_ref,
        out_ref):
    f32, bf16 = jnp.float32, jnp.bfloat16
    B, N, F = x_ref.shape
    adim = act_ref.shape[-1]

    def mm_bf16(a, w_bf16):      # big weight matmuls: bf16 in, f32 accumulate
        return jnp.dot(a.astype(bf16), w_bf16, preferred_element_type=f32)

    def mm_f32(a, b):            # tiny adjacency matmuls stay f32 (K = N = 8)
        return jnp.dot(a, b, preferred_element_type=f32)

    def adj_mm(h):               # per-graph A @ h, statically unrolled over B
        return jnp.concatenate(
            [mm_f32(a_ref[b], h[b * N:(b + 1) * N]) for b in range(B)], axis=0)

    x = x_ref[...].reshape(B * N, F)                                # (B*N, F)
    ax = adj_mm(x)                                                  # (B*N, F)

    # ----- fused actor|critic 2-layer GCN (shared matmuls) -----
    # layer 1: [a_gw1 | c_gw1]  -> (B*N, 2H)
    h = jnp.maximum(mm_bf16(ax, gw1_ref[...]) + gb1_ref[...], 0.0)
    # layer 2: one adjacency multiply + block-diag [[a_gw2,0],[0,c_gw2]] -> (B*N, 2E)
    h = mm_bf16(adj_mm(h), gw2_ref[...]) + gb2_ref[...]

    # mean-pool over nodes (sublane reduce, no pooling matmul)     # (B, 2E)
    g = jnp.concatenate(
        [jnp.mean(h[b * N:(b + 1) * N], axis=0, keepdims=True) for b in range(B)],
        axis=0)

    # ----- MLPs with a shared LHS [g_actor | g_critic | action] -----
    lhs = jnp.concatenate([g, act_ref[...]], axis=-1)               # (B, 2E+A)
    h_a = jnp.maximum(mm_bf16(lhs, aw1_ref[...]) + ab1_ref[...], 0.0)   # (B, h1)
    h_c = jnp.maximum(mm_bf16(lhs, cw1_ref[...]) + cb1_ref[...], 0.0)   # (B, h1)
    h_a = jnp.maximum(mm_bf16(h_a, aw2_ref[...]) + ab2_ref[...], 0.0)   # (B, h2)
    h_c = jnp.maximum(mm_bf16(h_c, cw2_ref[...]) + cb2_ref[...], 0.0)   # (B, h2)

    # actor head: lane-padded final layer -> (B, LANE_PAD) slab off the MXU
    # (pad columns have zero weight/bias so tanh(0) = 0 there)
    mean_slab = jnp.tanh(mm_bf16(h_a, aw3p_ref[...]) + ab3p_ref[...])

    # critic head: (h2 -> 1) as VPU multiply + lane reduce, not an N=1 MXU pass
    sv = jnp.tanh(jnp.sum(h_c * cw3r_ref[...], axis=-1, keepdims=True)
                  + cb3_ref[...])                                   # (B, 1)

    # ----- diagonal-covariance MultivariateNormal log_prob / entropy (f32) ---
    var = var_ref[...]                                              # (1, A)
    mean = mean_slab[:, :adim]                                      # (B, A)
    log2pi = math.log(2.0 * math.pi)
    logdet = jnp.sum(jnp.log(var), axis=-1, keepdims=True)          # (1, 1)
    diff = act_ref[...] - mean
    maha = jnp.sum(diff * diff / var, axis=-1, keepdims=True)       # (B, 1)
    lp = -0.5 * (maha + logdet + adim * log2pi)                     # (B, 1)
    ent = 0.5 * adim * (1.0 + log2pi) + 0.5 * logdet                # (1, 1)

    # ----- pack everything into one lane-dense slab; single unmasked store ---
    col = jax.lax.broadcasted_iota(jnp.int32, out_ref.shape, 1)
    out = mean_slab
    out = out + jnp.where(col == adim, sv, 0.0)
    out = out + jnp.where(col == adim + 1, lp, 0.0)
    out = out + jnp.where(col == adim + 2, ent, 0.0)
    out_ref[...] = out


# ----------------------------- one-time weight packing ------------------------

def prepare_params(p):
    """One-time layout plumbing: concatenate / block-diag / lane-pad / bf16-cast
    the weights so the per-call path has zero wrapper-side work."""
    bf16 = jnp.bfloat16
    F = p["a_gw1"].shape[0]
    H = p["a_gw1"].shape[1]
    E = p["a_gw2"].shape[1]
    hidden1 = p["a_w1"].shape[1]
    hidden2 = p["a_w2"].shape[1]
    adim = p["a_w3"].shape[1]
    assert adim + 3 <= LANE_PAD

    prep = {}
    # GCN layer 1: actor|critic concatenated on the output axis
    prep["gw1"] = jnp.concatenate([p["a_gw1"], p["c_gw1"]], axis=1).astype(bf16)  # (F, 2H)
    prep["gb1"] = jnp.concatenate([p["a_gb1"], p["c_gb1"]], axis=1)               # (1, 2H)
    # GCN layer 2: block-diagonal so one matmul serves both branches
    gw2 = jnp.zeros((2 * H, 2 * E), jnp.float32)
    gw2 = gw2.at[:H, :E].set(p["a_gw2"]).at[H:, E:].set(p["c_gw2"])
    prep["gw2"] = gw2.astype(bf16)                                                # (2H, 2E)
    prep["gb2"] = jnp.concatenate([p["a_gb2"], p["c_gb2"]], axis=1)               # (1, 2E)
    # first MLP layer: shared LHS [g_a | g_c | action] -> zero-padded weights
    K = 2 * E + adim
    aw1 = jnp.zeros((K, hidden1), jnp.float32).at[:E, :].set(p["a_w1"])
    cw1 = (jnp.zeros((K, hidden1), jnp.float32)
           .at[E:2 * E, :].set(p["c_w11"])
           .at[2 * E:, :].set(p["c_w12"]))
    prep["aw1"], prep["ab1"] = aw1.astype(bf16), p["a_b1"]
    prep["cw1"], prep["cb1"] = cw1.astype(bf16), p["c_b11"] + p["c_b12"]
    prep["aw2"], prep["ab2"] = p["a_w2"].astype(bf16), p["a_b2"]
    prep["cw2"], prep["cb2"] = p["c_w2"].astype(bf16), p["c_b2"]
    # actor head lane-padded to LANE_PAD (zero pad cols -> tanh(0)=0 invariant)
    aw3p = jnp.zeros((hidden2, LANE_PAD), jnp.float32).at[:, :adim].set(p["a_w3"])
    ab3p = jnp.zeros((1, LANE_PAD), jnp.float32).at[:, :adim].set(p["a_b3"])
    prep["aw3p"], prep["ab3p"] = aw3p.astype(bf16), ab3p
    # critic head as an f32 row vector (VPU path, no N=1 MXU pass)
    prep["cw3r"] = p["c_w3"].reshape(1, hidden2)
    prep["cb3"] = p["c_b3"]                                                       # (1, 1)
    return prep


# ----------------------------- wrapper ----------------------------------------

def actor_critic_evaluate(prep, A, X, action, action_var):
    """Pallas implementation of ActorCritic.evaluate(state, action).

    Returns (log_probs, state_value, entropy, action_mean).
    """
    B = X.shape[0]
    adim = action.shape[-1]
    out = pl.pallas_call(
        fused_actor_critic_kernel,
        out_shape=jax.ShapeDtypeStruct((B, LANE_PAD), jnp.float32),
        # No grid: the whole working set (< 2 MiB) is mapped into VMEM.
        # For large B, add a ("parallel",) batch grid axis (v7x 2-TC sharding).
    )(A, X, action, action_var,
      prep["gw1"], prep["gb1"], prep["gw2"], prep["gb2"],
      prep["aw1"], prep["ab1"], prep["cw1"], prep["cb1"],
      prep["aw2"], prep["ab2"], prep["cw2"], prep["cb2"],
      prep["aw3p"], prep["ab3p"], prep["cw3r"], prep["cb3"])

    action_mean = out[:, :adim]
    state_value = out[:, adim]
    log_probs = out[:, adim + 1]
    entropy = out[:, adim + 2]
    return log_probs, state_value, entropy, action_mean


# ----------------------------- reference (pure JAX) ---------------------------

def _ref_evaluate(params, A, X, action, action_var):
    hp = jax.lax.Precision.HIGHEST
    p = params

    def gcn(gw1, gb1, gw2, gb2):
        h1 = jax.nn.relu(jnp.einsum("bnm,bmf,fh->bnh", A, X, gw1, precision=hp) + gb1)
        h2 = jnp.einsum("bnm,bmh,he->bne", A, h1, gw2, precision=hp) + gb2
        return jnp.mean(h2, axis=1)

    g_a = gcn(p["a_gw1"], p["a_gb1"], p["a_gw2"], p["a_gb2"])
    h = jax.nn.relu(jnp.dot(g_a, p["a_w1"], precision=hp) + p["a_b1"])
    h = jax.nn.relu(jnp.dot(h, p["a_w2"], precision=hp) + p["a_b2"])
    action_mean = jnp.tanh(jnp.dot(h, p["a_w3"], precision=hp) + p["a_b3"])

    g_c = gcn(p["c_gw1"], p["c_gb1"], p["c_gw2"], p["c_gb2"])
    h = jax.nn.relu(jnp.dot(g_c, p["c_w11"], precision=hp) + p["c_b11"]
                    + jnp.dot(action, p["c_w12"], precision=hp) + p["c_b12"])
    h = jax.nn.relu(jnp.dot(h, p["c_w2"], precision=hp) + p["c_b2"])
    state_value = jnp.tanh(jnp.dot(h, p["c_w3"], precision=hp) + p["c_b3"])

    d = action_mean.shape[-1]
    log2pi = math.log(2.0 * math.pi)
    logdet = jnp.sum(jnp.log(action_var))
    maha = jnp.sum((action - action_mean) ** 2 / action_var, axis=-1)
    lp = -0.5 * (maha + logdet + d * log2pi)
    ent = jnp.full((action.shape[0],), 0.5 * d * (1.0 + log2pi) + 0.5 * logdet)
    return lp, jnp.squeeze(state_value, axis=-1), ent, action_mean


# ----------------------------- setup -----------------------------------------

def _linear_init(key, fan_in, fan_out):
    kw, kb = jax.random.split(key)
    bound = 1.0 / math.sqrt(fan_in)
    w = jax.random.uniform(kw, (fan_in, fan_out), jnp.float32, -bound, bound)
    b = jax.random.uniform(kb, (1, fan_out), jnp.float32, -bound, bound)
    return w, b


def make_params(key, node_feat, g_hidden, g_embed, hidden1, hidden2, action_dim):
    keys = jax.random.split(key, 12)
    p = {}
    p["a_gw1"], p["a_gb1"] = _linear_init(keys[0], node_feat, g_hidden)
    p["a_gw2"], p["a_gb2"] = _linear_init(keys[1], g_hidden, g_embed)
    p["a_w1"], p["a_b1"] = _linear_init(keys[2], g_embed, hidden1)
    p["a_w2"], p["a_b2"] = _linear_init(keys[3], hidden1, hidden2)
    p["a_w3"], p["a_b3"] = _linear_init(keys[4], hidden2, action_dim)
    p["c_gw1"], p["c_gb1"] = _linear_init(keys[5], node_feat, g_hidden)
    p["c_gw2"], p["c_gb2"] = _linear_init(keys[6], g_hidden, g_embed)
    p["c_w11"], p["c_b11"] = _linear_init(keys[7], g_embed, hidden1)
    p["c_w12"], p["c_b12"] = _linear_init(keys[8], action_dim, hidden1)
    p["c_w2"], p["c_b2"] = _linear_init(keys[9], hidden1, hidden2)
    p["c_w3"], p["c_b3"] = _linear_init(keys[10], hidden2, 1)
    return p


def make_adjacency(B, N):
    idx = jnp.arange(N)
    A = jnp.zeros((N, N), jnp.float32)
    A = A.at[idx, (idx + 1) % N].set(1.0)
    A = A.at[idx, (idx - 1) % N].set(1.0)
    A = A + jnp.eye(N, dtype=jnp.float32)
    dinv = 1.0 / jnp.sqrt(A.sum(-1))
    A_hat = A * dinv[:, None] * dinv[None, :]
    return jnp.broadcast_to(A_hat, (B, N, N))


if __name__ == "__main__":
    # small shapes consistent with the module
    B, N = 2, 8                 # batch of graphs, nodes per graph
    state_dim = 16              # node_feature_size
    g_hidden, g_embed = 50, 50  # GraphEncoder_GCN sizes (nb_states)
    hidden1, hidden2 = 400, 300 # ActorNetwork / CriticNetwork defaults
    action_dim = 8
    action_std = 0.5

    key = jax.random.PRNGKey(0)
    k_p, k_x, k_a = jax.random.split(key, 3)

    params = make_params(k_p, state_dim, g_hidden, g_embed, hidden1, hidden2, action_dim)
    X = jax.random.normal(k_x, (B, N, state_dim), jnp.float32)
    A = make_adjacency(B, N)
    action = jax.random.normal(k_a, (B, action_dim), jnp.float32)
    action_var = jnp.full((1, action_dim), action_std * action_std, jnp.float32)

    # one-time packing/padding/bf16 cast (hoisted out of the per-call path)
    prep = jax.tree_util.tree_map(jax.block_until_ready, prepare_params(params))

    evaluate = jax.jit(actor_critic_evaluate)
    log_probs, state_value, entropy, action_mean = jax.block_until_ready(
        evaluate(prep, A, X, action, action_var))

    # correctness check against a pure-JAX reference
    r_lp, r_sv, r_ent, r_mean = _ref_evaluate(params, A, X, action, action_var)
    assert jnp.allclose(action_mean, r_mean, atol=1e-2, rtol=1e-2)
    assert jnp.allclose(state_value, r_sv, atol=1e-2, rtol=1e-2)
    assert jnp.allclose(log_probs, r_lp, atol=1e-2, rtol=1e-2)
    assert jnp.allclose(entropy, r_ent, atol=1e-2, rtol=1e-2)

    print("KERNEL_OK")
</pallas_src>

<mosaic_0001>
module attributes {stable_mosaic.version = 11 : i64} {
  func.func @fused_actor_critic_kernel(%arg0: memref<2x8x8xf32, #tpu.memory_space<vmem>>, %arg1: memref<2x8x16xf32, #tpu.memory_space<vmem>>, %arg2: memref<2x8xf32, #tpu.memory_space<vmem>>, %arg3: memref<1x8xf32, #tpu.memory_space<vmem>>, %arg4: memref<16x100xbf16, #tpu.memory_space<vmem>>, %arg5: memref<1x100xf32, #tpu.memory_space<vmem>>, %arg6: memref<100x100xbf16, #tpu.memory_space<vmem>>, %arg7: memref<1x100xf32, #tpu.memory_space<vmem>>, %arg8: memref<108x400xbf16, #tpu.memory_space<vmem>>, %arg9: memref<1x400xf32, #tpu.memory_space<vmem>>, %arg10: memref<108x400xbf16, #tpu.memory_space<vmem>>, %arg11: memref<1x400xf32, #tpu.memory_space<vmem>>, %arg12: memref<400x300xbf16, #tpu.memory_space<vmem>>, %arg13: memref<1x300xf32, #tpu.memory_space<vmem>>, %arg14: memref<400x300xbf16, #tpu.memory_space<vmem>>, %arg15: memref<1x300xf32, #tpu.memory_space<vmem>>, %arg16: memref<300x128xbf16, #tpu.memory_space<vmem>>, %arg17: memref<1x128xf32, #tpu.memory_space<vmem>>, %arg18: memref<1x300xf32, #tpu.memory_space<vmem>>, %arg19: memref<1x1xf32, #tpu.memory_space<vmem>>, %arg20: memref<2x128xf32, #tpu.memory_space<vmem>>) attributes {dimension_semantics = [], scalar_prefetch = 0 : i64, scratch_operands = 0 : i64, tpu.core_type = #tpu.core_type<tc>} {
    %c0 = arith.constant 0 : index
    %c0_0 = arith.constant 0 : index
    %c0_1 = arith.constant 0 : index
    %0 = vector.load %arg1[%c0, %c0_0, %c0_1] : memref<2x8x16xf32, #tpu.memory_space<vmem>>, vector<2x8x16xf32>
    %1 = vector.shape_cast %0 : vector<2x8x16xf32> to vector<16x16xf32>
    %c0_2 = arith.constant 0 : index
    %c0_3 = arith.constant 0 : index
    %c0_4 = arith.constant 0 : index
    %2 = vector.load %arg0[%c0_2, %c0_3, %c0_4] : memref<2x8x8xf32, #tpu.memory_space<vmem>>, vector<1x8x8xf32>
    %3 = vector.shape_cast %2 : vector<1x8x8xf32> to vector<8x8xf32>
    %4 = vector.extract_strided_slice %1 {offsets = [0, 0], sizes = [8, 16], strides = [1, 1]} : vector<16x16xf32> to vector<8x16xf32>
    %cst = arith.constant dense<0.000000e+00> : vector<8x16xf32>
    %5 = tpu.matmul %3, %4, %cst {dimension_numbers = #tpu.dot_dimension_numbers<[1], [0], [0], [1], [0, 0, 1, 1], [], []>} : vector<8x8xf32>, vector<8x16xf32>, vector<8x16xf32> -> vector<8x16xf32>
    %c1 = arith.constant 1 : index
    %c0_5 = arith.constant 0 : index
    %c0_6 = arith.constant 0 : index
    %6 = vector.load %arg0[%c1, %c0_5, %c0_6] : memref<2x8x8xf32, #tpu.memory_space<vmem>>, vector<1x8x8xf32>
    %7 = vector.shape_cast %6 : vector<1x8x8xf32> to vector<8x8xf32>
    %8 = vector.extract_strided_slice %1 {offsets = [8, 0], sizes = [8, 16], strides = [1, 1]} : vector<16x16xf32> to vector<8x16xf32>
    %cst_7 = arith.constant dense<0.000000e+00> : vector<8x16xf32>
    %9 = tpu.matmul %7, %8, %cst_7 {dimension_numbers = #tpu.dot_dimension_numbers<[1], [0], [0], [1], [0, 0, 1, 1], [], []>} : vector<8x8xf32>, vector<8x16xf32>, vector<8x16xf32> -> vector<8x16xf32>
    %10 = tpu.concatenate %5, %9 in 0 : vector<8x16xf32>, vector<8x16xf32> -> vector<16x16xf32>
    %c0_8 = arith.constant 0 : index
    %c0_9 = arith.constant 0 : index
    %11 = vector.load %arg4[%c0_8, %c0_9] : memref<16x100xbf16, #tpu.memory_space<vmem>>, vector<16x100xbf16>
    %12 = arith.truncf %10 : vector<16x16xf32> to vector<16x16xbf16>
    %cst_10 = arith.constant dense<0.000000e+00> : vector<16x100xf32>
    %13 = tpu.matmul %12, %11, %cst_10 {dimension_numbers = #tpu.dot_dimension_numbers<[1], [0], [0], [1], [0, 0, 1, 1], [], []>} : vector<16x16xbf16>, vector<16x100xbf16>, vector<16x100xf32> -> vector<16x100xf32>
    %c0_11 = arith.constant 0 : index
    %c0_12 = arith.constant 0 : index
    %14 = vector.load %arg5[%c0_11, %c0_12] : memref<1x100xf32, #tpu.memory_space<vmem>>, vector<1x100xf32>
    %15 = vector.broadcast %14 : vector<1x100xf32> to vector<16x100xf32>
    %16 = arith.addf %13, %15 : vector<16x100xf32>
    %cst_13 = arith.constant 0.000000e+00 : f32
    %17 = vector.broadcast %cst_13 : f32 to vector<16x100xf32>
    %18 = arith.maximumf %16, %17 : vector<16x100xf32>
    %c0_14 = arith.constant 0 : index
    %c0_15 = arith.constant 0 : index
    %c0_16 = arith.constant 0 : index
    %19 = vector.load %arg0[%c0_14, %c0_15, %c0_16] : memref<2x8x8xf32, #tpu.memory_space<vmem>>, vector<1x8x8xf32>
    %20 = vector.shape_cast %19 : vector<1x8x8xf32> to vector<8x8xf32>
    %21 = vector.extract_strided_slice %18 {offsets = [0, 0], sizes = [8, 100], strides = [1, 1]} : vector<16x100xf32> to vector<8x100xf32>
    %cst_17 = arith.constant dense<0.000000e+00> : vector<8x100xf32>
    %22 = tpu.matmul %20, %21, %cst_17 {dimension_numbers = #tpu.dot_dimension_numbers<[1], [0], [0], [1], [0, 0, 1, 1], [], []>} : vector<8x8xf32>, vector<8x100xf32>, vector<8x100xf32> -> vector<8x100xf32>
    %c1_18 = arith.constant 1 : index
    %c0_19 = arith.constant 0 : index
    %c0_20 = arith.constant 0 : index
    %23 = vector.load %arg0[%c1_18, %c0_19, %c0_20] : memref<2x8x8xf32, #tpu.memory_space<vmem>>, vector<1x8x8xf32>
    %24 = vector.shape_cast %23 : vector<1x8x8xf32> to vector<8x8xf32>
    %25 = vector.extract_strided_slice %18 {offsets = [8, 0], sizes = [8, 100], strides = [1, 1]} : vector<16x100xf32> to vector<8x100xf32>
    %cst_21 = arith.constant dense<0.000000e+00> : vector<8x100xf32>
    %26 = tpu.matmul %24, %25, %cst_21 {dimension_numbers = #tpu.dot_dimension_numbers<[1], [0], [0], [1], [0, 0, 1, 1], [], []>} : vector<8x8xf32>, vector<8x100xf32>, vector<8x100xf32> -> vector<8x100xf32>
    %27 = tpu.concatenate %22, %26 in 0 : vector<8x100xf32>, vector<8x100xf32> -> vector<16x100xf32>
    %c0_22 = arith.constant 0 : index
    %c0_23 = arith.constant 0 : index
    %28 = vector.load %arg6[%c0_22, %c0_23] : memref<100x100xbf16, #tpu.memory_space<vmem>>, vector<100x100xbf16>
    %29 = arith.truncf %27 : vector<16x100xf32> to vector<16x100xbf16>
    %cst_24 = arith.constant dense<0.000000e+00> : vector<16x100xf32>
    %30 = tpu.matmul %29, %28, %cst_24 {dimension_numbers = #tpu.dot_dimension_numbers<[1], [0], [0], [1], [0, 0, 1, 1], [], []>} : vector<16x100xbf16>, vector<100x100xbf16>, vector<16x100xf32> -> vector<16x100xf32>
    %c0_25 = arith.constant 0 : index
    %c0_26 = arith.constant 0 : index
    %31 = vector.load %arg7[%c0_25, %c0_26] : memref<1x100xf32, #tpu.memory_space<vmem>>, vector<1x100xf32>
    %32 = vector.broadcast %31 : vector<1x100xf32> to vector<16x100xf32>
    %33 = arith.addf %30, %32 : vector<16x100xf32>
    %34 = vector.extract_strided_slice %33 {offsets = [0, 0], sizes = [8, 100], strides = [1, 1]} : vector<16x100xf32> to vector<8x100xf32>
    %cst_27 = arith.constant dense<0.000000e+00> : vector<100xf32>
    %35 = vector.multi_reduction <add>, %34, %cst_27 [0] : vector<8x100xf32> to vector<100xf32>
    %36 = vector.shape_cast %35 : vector<100xf32> to vector<1x100xf32>
    %cst_28 = arith.constant 8.000000e+00 : f32
    %37 = vector.broadcast %cst_28 : f32 to vector<1x100xf32>
    %38 = arith.divf %36, %37 : vector<1x100xf32>
    %39 = vector.extract_strided_slice %33 {offsets = [8, 0], sizes = [8, 100], strides = [1, 1]} : vector<16x100xf32> to vector<8x100xf32>
    %cst_29 = arith.constant dense<0.000000e+00> : vector<100xf32>
    %40 = vector.multi_reduction <add>, %39, %cst_29 [0] : vector<8x100xf32> to vector<100xf32>
    %41 = vector.shape_cast %40 : vector<100xf32> to vector<1x100xf32>
    %cst_30 = arith.constant 8.000000e+00 : f32
    %42 = vector.broadcast %cst_30 : f32 to vector<1x100xf32>
    %43 = arith.divf %41, %42 : vector<1x100xf32>
    %44 = tpu.concatenate %38, %43 in 0 : vector<1x100xf32>, vector<1x100xf32> -> vector<2x100xf32>
    %c0_31 = arith.constant 0 : index
    %c0_32 = arith.constant 0 : index
    %45 = vector.load %arg2[%c0_31, %c0_32] : memref<2x8xf32, #tpu.memory_space<vmem>>, vector<2x8xf32>
    %46 = tpu.concatenate %44, %45 in 1 : vector<2x100xf32>, vector<2x8xf32> -> vector<2x108xf32>
    %c0_33 = arith.constant 0 : index
    %c0_34 = arith.constant 0 : index
    %47 = vector.load %arg8[%c0_33, %c0_34] : memref<108x400xbf16, #tpu.memory_space<vmem>>, vector<108x400xbf16>
    %48 = arith.truncf %46 : vector<2x108xf32> to vector<2x108xbf16>
    %cst_35 = arith.constant dense<0.000000e+00> : vector<2x400xf32>
    %49 = tpu.matmul %48, %47, %cst_35 {dimension_numbers = #tpu.dot_dimension_numbers<[1], [0], [0], [1], [0, 0, 1, 1], [], []>} : vector<2x108xbf16>, vector<108x400xbf16>, vector<2x400xf32> -> vector<2x400xf32>
    %c0_36 = arith.constant 0 : index
    %c0_37 = arith.constant 0 : index
    %50 = vector.load %arg9[%c0_36, %c0_37] : memref<1x400xf32, #tpu.memory_space<vmem>>, vector<1x400xf32>
    %51 = vector.broadcast %50 : vector<1x400xf32> to vector<2x400xf32>
    %52 = arith.addf %49, %51 : vector<2x400xf32>
    %cst_38 = arith.constant 0.000000e+00 : f32
    %53 = vector.broadcast %cst_38 : f32 to vector<2x400xf32>
    %54 = arith.maximumf %52, %53 : vector<2x400xf32>
    %c0_39 = arith.constant 0 : index
    %c0_40 = arith.constant 0 : index
    %55 = vector.load %arg10[%c0_39, %c0_40] : memref<108x400xbf16, #tpu.memory_space<vmem>>, vector<108x400xbf16>
    %56 = arith.truncf %46 : vector<2x108xf32> to vector<2x108xbf16>
    %cst_41 = arith.constant dense<0.000000e+00> : vector<2x400xf32>
    %57 = tpu.matmul %56, %55, %cst_41 {dimension_numbers = #tpu.dot_dimension_numbers<[1], [0], [0], [1], [0, 0, 1, 1], [], []>} : vector<2x108xbf16>, vector<108x400xbf16>, vector<2x400xf32> -> vector<2x400xf32>
    %c0_42 = arith.constant 0 : index
    %c0_43 = arith.constant 0 : index
    %58 = vector.load %arg11[%c0_42, %c0_43] : memref<1x400xf32, #tpu.memory_space<vmem>>, vector<1x400xf32>
    %59 = vector.broadcast %58 : vector<1x400xf32> to vector<2x400xf32>
    %60 = arith.addf %57, %59 : vector<2x400xf32>
    %cst_44 = arith.constant 0.000000e+00 : f32
    %61 = vector.broadcast %cst_44 : f32 to vector<2x400xf32>
    %62 = arith.maximumf %60, %61 : vector<2x400xf32>
    %c0_45 = arith.constant 0 : index
    %c0_46 = arith.constant 0 : index
    %63 = vector.load %arg12[%c0_45, %c0_46] : memref<400x300xbf16, #tpu.memory_space<vmem>>, vector<400x300xbf16>
    %64 = arith.truncf %54 : vector<2x400xf32> to vector<2x400xbf16>
    %cst_47 = arith.constant dense<0.000000e+00> : vector<2x300xf32>
    %65 = tpu.matmul %64, %63, %cst_47 {dimension_numbers = #tpu.dot_dimension_numbers<[1], [0], [0], [1], [0, 0, 1, 1], [], []>} : vector<2x400xbf16>, vector<400x300xbf16>, vector<2x300xf32> -> vector<2x300xf32>
    %c0_48 = arith.constant 0 : index
    %c0_49 = arith.constant 0 : index
    %66 = vector.load %arg13[%c0_48, %c0_49] : memref<1x300xf32, #tpu.memory_space<vmem>>, vector<1x300xf32>
    %67 = vector.broadcast %66 : vector<1x300xf32> to vector<2x300xf32>
    %68 = arith.addf %65, %67 : vector<2x300xf32>
    %cst_50 = arith.constant 0.000000e+00 : f32
    %69 = vector.broadcast %cst_50 : f32 to vector<2x300xf32>
    %70 = arith.maximumf %68, %69 : vector<2x300xf32>
    %c0_51 = arith.constant 0 : index
    %c0_52 = arith.constant 0 : index
    %71 = vector.load %arg14[%c0_51, %c0_52] : memref<400x300xbf16, #tpu.memory_space<vmem>>, vector<400x300xbf16>
    %72 = arith.truncf %62 : vector<2x400xf32> to vector<2x400xbf16>
    %cst_53 = arith.constant dense<0.000000e+00> : vector<2x300xf32>
    %73 = tpu.matmul %72, %71, %cst_53 {dimension_numbers = #tpu.dot_dimension_numbers<[1], [0], [0], [1], [0, 0, 1, 1], [], []>} : vector<2x400xbf16>, vector<400x300xbf16>, vector<2x300xf32> -> vector<2x300xf32>
    %c0_54 = arith.constant 0 : index
    %c0_55 = arith.constant 0 : index
    %74 = vector.load %arg15[%c0_54, %c0_55] : memref<1x300xf32, #tpu.memory_space<vmem>>, vector<1x300xf32>
    %75 = vector.broadcast %74 : vector<1x300xf32> to vector<2x300xf32>
    %76 = arith.addf %73, %75 : vector<2x300xf32>
    %cst_56 = arith.constant 0.000000e+00 : f32
    %77 = vector.broadcast %cst_56 : f32 to vector<2x300xf32>
    %78 = arith.maximumf %76, %77 : vector<2x300xf32>
    %c0_57 = arith.constant 0 : index
    %c0_58 = arith.constant 0 : index
    %79 = vector.load %arg16[%c0_57, %c0_58] : memref<300x128xbf16, #tpu.memory_space<vmem>>, vector<300x128xbf16>
    %80 = arith.truncf %70 : vector<2x300xf32> to vector<2x300xbf16>
    %cst_59 = arith.constant dense<0.000000e+00> : vector<2x128xf32>
    %81 = tpu.matmul %80, %79, %cst_59 {dimension_numbers = #tpu.dot_dimension_numbers<[1], [0], [0], [1], [0, 0, 1, 1], [], []>} : vector<2x300xbf16>, vector<300x128xbf16>, vector<2x128xf32> -> vector<2x128xf32>
    %c0_60 = arith.constant 0 : index
    %c0_61 = arith.constant 0 : index
    %82 = vector.load %arg17[%c0_60, %c0_61] : memref<1x128xf32, #tpu.memory_space<vmem>>, vector<1x128xf32>
    %83 = vector.broadcast %82 : vector<1x128xf32> to vector<2x128xf32>
    %84 = arith.addf %81, %83 : vector<2x128xf32>
    %85 = math.tanh %84 : vector<2x128xf32>
    %c0_62 = arith.constant 0 : index
    %c0_63 = arith.constant 0 : index
    %86 = vector.load %arg18[%c0_62, %c0_63] : memref<1x300xf32, #tpu.memory_space<vmem>>, vector<1x300xf32>
    %87 = vector.broadcast %86 : vector<1x300xf32> to vector<2x300xf32>
    %88 = arith.mulf %78, %87 : vector<2x300xf32>
    %cst_64 = arith.constant dense<0.000000e+00> : vector<2xf32>
    %89 = vector.multi_reduction <add>, %88, %cst_64 [1] : vector<2x300xf32> to vector<2xf32>
    %90 = vector.shape_cast %89 : vector<2xf32> to vector<2x1xf32>
    %c0_65 = arith.constant 0 : index
    %c0_66 = arith.constant 0 : index
    %91 = vector.load %arg19[%c0_65, %c0_66] : memref<1x1xf32, #tpu.memory_space<vmem>>, vector<1x1xf32>
    %92 = vector.broadcast %91 : vector<1x1xf32> to vector<2x1xf32>
    %93 = arith.addf %90, %92 : vector<2x1xf32>
    %94 = math.tanh %93 : vector<2x1xf32>
    %c0_67 = arith.constant 0 : index
    %c0_68 = arith.constant 0 : index
    %95 = vector.load %arg3[%c0_67, %c0_68] : memref<1x8xf32, #tpu.memory_space<vmem>>, vector<1x8xf32>
    %96 = vector.extract_strided_slice %85 {offsets = [0, 0], sizes = [2, 8], strides = [1, 1]} : vector<2x128xf32> to vector<2x8xf32>
    %97 = math.log %95 : vector<1x8xf32>
    %cst_69 = arith.constant dense<0.000000e+00> : vector<1xf32>
    %98 = vector.multi_reduction <add>, %97, %cst_69 [1] : vector<1x8xf32> to vector<1xf32>
    %99 = vector.shape_cast %98 : vector<1xf32> to vector<1x1xf32>
    %c0_70 = arith.constant 0 : index
    %c0_71 = arith.constant 0 : index
    %100 = vector.load %arg2[%c0_70, %c0_71] : memref<2x8xf32, #tpu.memory_space<vmem>>, vector<2x8xf32>
    %101 = arith.subf %100, %96 : vector<2x8xf32>
    %102 = arith.mulf %101, %101 : vector<2x8xf32>
    %103 = vector.broadcast %95 : vector<1x8xf32> to vector<2x8xf32>
    %104 = arith.divf %102, %103 : vector<2x8xf32>
    %cst_72 = arith.constant dense<0.000000e+00> : vector<2xf32>
    %105 = vector.multi_reduction <add>, %104, %cst_72 [1] : vector<2x8xf32> to vector<2xf32>
    %106 = vector.shape_cast %105 : vector<2xf32> to vector<2x1xf32>
    %107 = vector.broadcast %99 : vector<1x1xf32> to vector<2x1xf32>
    %108 = arith.addf %106, %107 : vector<2x1xf32>
    %cst_73 = arith.constant 14.7030163 : f32
    %109 = vector.broadcast %cst_73 : f32 to vector<2x1xf32>
    %110 = arith.addf %108, %109 : vector<2x1xf32>
    %cst_74 = arith.constant -5.000000e-01 : f32
    %111 = vector.broadcast %cst_74 : f32 to vector<2x1xf32>
    %112 = arith.mulf %111, %110 : vector<2x1xf32>
    %cst_75 = arith.constant 5.000000e-01 : f32
    %113 = vector.broadcast %cst_75 : f32 to vector<1x1xf32>
    %114 = arith.mulf %113, %99 : vector<1x1xf32>
    %cst_76 = arith.constant 11.3515081 : f32
    %115 = vector.broadcast %cst_76 : f32 to vector<1x1xf32>
    %116 = arith.addf %115, %114 : vector<1x1xf32>
    %117 = tpu.iota {dimensions = array<i32: 1>} : vector<2x128xi32>
    %c8_i32 = arith.constant 8 : i32
    %118 = vector.broadcast %c8_i32 : i32 to vector<2x128xi32>
    %119 = arith.cmpi eq, %117, %118 : vector<2x128xi32>
    %cst_77 = arith.constant 0.000000e+00 : f32
    %120 = vector.shape_cast %94 : vector<2x1xf32> to vector<2x1xf32>
    %121 = vector.broadcast %120 : vector<2x1xf32> to vector<2x128xf32>
    %122 = vector.broadcast %cst_77 : f32 to vector<2x128xf32>
    %123 = arith.select %119, %121, %122 : vector<2x128xi1>, vector<2x128xf32>
    %124 = arith.addf %85, %123 : vector<2x128xf32>
    %c9_i32 = arith.constant 9 : i32
    %125 = vector.broadcast %c9_i32 : i32 to vector<2x128xi32>
    %126 = arith.cmpi eq, %117, %125 : vector<2x128xi32>
    %cst_78 = arith.constant 0.000000e+00 : f32
    %127 = vector.shape_cast %112 : vector<2x1xf32> to vector<2x1xf32>
    %128 = vector.broadcast %127 : vector<2x1xf32> to vector<2x128xf32>
    %129 = vector.broadcast %cst_78 : f32 to vector<2x128xf32>
    %130 = arith.select %126, %128, %129 : vector<2x128xi1>, vector<2x128xf32>
    %131 = arith.addf %124, %130 : vector<2x128xf32>
    %c10_i32 = arith.constant 10 : i32
    %132 = vector.broadcast %c10_i32 : i32 to vector<2x128xi32>
    %133 = arith.cmpi eq, %117, %132 : vector<2x128xi32>
    %cst_79 = arith.constant 0.000000e+00 : f32
    %134 = vector.shape_cast %116 : vector<1x1xf32> to vector<1x1xf32>
    %135 = vector.broadcast %134 : vector<1x1xf32> to vector<2x128xf32>
    %136 = vector.broadcast %cst_79 : f32 to vector<2x128xf32>
    %137 = arith.select %133, %135, %136 : vector<2x128xi1>, vector<2x128xf32>
    %138 = arith.addf %131, %137 : vector<2x128xf32>
    %c0_80 = arith.constant 0 : index
    %c0_81 = arith.constant 0 : index
    %139 = vector.load %arg20[%c0_80, %c0_81] : memref<2x128xf32, #tpu.memory_space<vmem>>, vector<2x128xf32>
    tpu.vector_store %arg20[%c0_80, %c0_81], %138 {strides = array<i32>} : memref<2x128xf32, #tpu.memory_space<vmem>>, vector<2x128xf32>,
    return
  }
}

</mosaic_0001>

<llo_original>
// kernel: actor_critic_evaluate.1
$region0: #{actor_critic_evaluate.1}
  #allocation0 [shape = 'u32[]', space=smem, size = 0x4, offset = 0x4, fixed_abs, tag = 'smem constant byte address 0x4 - core index']
  #allocation1 [shape = 'u32[144,128]{1,0:T(1,128)}', space=vmem, size = 0x12000, scoped, tag = 'internal scratch']
  #allocation2 [shape = 'f32[1,1]{1,0:T(1,128)S(1)}', space=vmem, size = 0x200, scoped, tag = 'scoped memory for actor_critic_evaluate.1']
  %s0 = inlined_call_operand.vmem [shape: f32[2,8,8], index: 0, kind: input, shape index: {}]
  %s1 = inlined_call_operand.vmem [shape: f32[2,8,16], index: 1, kind: input, shape index: {}]
  %s2 = inlined_call_operand.vmem [shape: f32[2,8], index: 2, kind: input, shape index: {}]
  %s3 = inlined_call_operand.vmem [shape: f32[1,8], index: 3, kind: input, shape index: {}]
  %s4 = inlined_call_operand.vmem [shape: bf16[16,100], index: 4, kind: input, shape index: {}]
  %s5 = inlined_call_operand.hbm [shape: f32[1,100], index: 5, kind: input, shape index: {}]
  %s6 = inlined_call_operand.vmem [shape: bf16[100,100], index: 6, kind: input, shape index: {}]
  %s7 = inlined_call_operand.hbm [shape: f32[1,100], index: 7, kind: input, shape index: {}]
  %s8 = inlined_call_operand.vmem [shape: bf16[108,400], index: 8, kind: input, shape index: {}]
  %s9 = inlined_call_operand.hbm [shape: f32[1,400], index: 9, kind: input, shape index: {}]
  %s10 = inlined_call_operand.vmem [shape: bf16[108,400], index: 10, kind: input, shape index: {}]
  %s11 = inlined_call_operand.hbm [shape: f32[1,400], index: 11, kind: input, shape index: {}]
  %s12 = inlined_call_operand.vmem [shape: bf16[400,300], index: 12, kind: input, shape index: {}]
  %s13 = inlined_call_operand.hbm [shape: f32[1,300], index: 13, kind: input, shape index: {}]
  %s14 = inlined_call_operand.hbm [shape: bf16[400,300], index: 14, kind: input, shape index: {}]
  %s15 = inlined_call_operand.hbm [shape: f32[1,300], index: 15, kind: input, shape index: {}]
  %s16 = inlined_call_operand.hbm [shape: bf16[300,128], index: 16, kind: input, shape index: {}]
  %s17 = inlined_call_operand.hbm [shape: f32[1,128], index: 17, kind: input, shape index: {}]
  %s18 = inlined_call_operand.hbm [shape: f32[1,300], index: 18, kind: input, shape index: {}]
  %s19 = inlined_call_operand.<no memory space> [shape: f32[1,1], index: 19, kind: input, shape index: {}]
  %s20 = inlined_call_operand.vmem [shape: f32[2,128], index: 20, kind: output, shape index: {}]
  %s21 = sld [smem:[#allocation0]]
  $region130: #{actor_critic_evaluate.1} parent=0
    _
  %s23 = ssub.s32 1, %s21
  %s24 = scalar_select 0, %s23, %s21
  %v25 = vstv %s19
  %26 = vst [vmem:[#allocation2] sm:$0x1] %v25
  $region1: #{actor_critic_evaluate.1} parent=0
    #allocation3 [shape = 'u8[512]{0}', space=vmem, size = 0x400, scoped, tag = 'input window, operand 5, single buffered']
    #allocation4 [shape = 's32[1]{0}', space=sflag, size = 0x4, scoped, tag = 'scoped memory for actor_critic_evaluate.1']
    #allocation5 [shape = 'u8[512]{0}', space=vmem, size = 0x400, scoped, tag = 'input window, operand 7, single buffered']
    #allocation6 [shape = 's32[1]{0}', space=sflag, size = 0x4, scoped, tag = 'scoped memory for actor_critic_evaluate.1']
    #allocation7 [shape = 'u8[2048]{0}', space=vmem, size = 0x800, scoped, tag = 'input window, operand 9, single buffered']
    #allocation8 [shape = 'u8[2048]{0}', space=vmem, size = 0x800, scoped, tag = 'input window, operand 11, single buffered']
    #allocation9 [shape = 's32[1]{0}', space=sflag, size = 0x4, scoped, tag = 'scoped memory for actor_critic_evaluate.1']
    #allocation10 [shape = 'u8[1536]{0}', space=vmem, size = 0x800, scoped, tag = 'input window, operand 13, single buffered']
    #allocation11 [shape = 'u8[307200]{0}', space=vmem, size = 0x4b000, scoped, tag = 'input window, operand 14, single buffered']
    #allocation12 [shape = 's32[1]{0}', space=sflag, size = 0x4, scoped, tag = 'scoped memory for actor_critic_evaluate.1']
    #allocation13 [shape = 'u8[1536]{0}', space=vmem, size = 0x800, scoped, tag = 'input window, operand 15, single buffered']
    #allocation14 [shape = 'u8[77824]{0}', space=vmem, size = 0x13000, scoped, tag = 'input window, operand 16, single buffered']
    #allocation15 [shape = 's32[1]{0}', space=sflag, size = 0x4, scoped, tag = 'scoped memory for actor_critic_evaluate.1']
    #allocation16 [shape = 'u8[512]{0}', space=vmem, size = 0x400, scoped, tag = 'input window, operand 17, single buffered']
    #allocation17 [shape = 'u8[1536]{0}', space=vmem, size = 0x800, scoped, tag = 'input window, operand 18, single buffered']
    #allocation18 [shape = 's32[1]{0}', space=sflag, size = 0x4, scoped, tag = 'scoped memory for actor_critic_evaluate.1']
    %27 = vsyncpa [#allocation4], 0
    %28 = vsyncpa [#allocation6], 0
    %29 = vsyncpa [#allocation9], 0
    %30 = vsyncpa [#allocation12], 0
    %31 = vsyncpa [#allocation15], 0
    %32 = vsyncpa [#allocation18], 0
    // Predicated region
    $region2: #{actor_critic_evaluate.1} parent=1 // pred_check
      _
    $region3: #{actor_critic_evaluate.1} parent=1 // pred_check_branch
      %34 = sbr.rel (0) target = $region5
    $region4: #{actor_critic_evaluate.1} parent=1 // pred_region
      _
    $region5: #{actor_critic_evaluate.1} parent=1 // pred_fallthru
      _
    // Predicated region
    $region6: #{actor_critic_evaluate.1} parent=1 // pred_check
      _
    $region7: #{actor_critic_evaluate.1} parent=1 // pred_check_branch
      %36 = sbr.rel (0) target = $region9
    $region8: #{actor_critic_evaluate.1} parent=1 // pred_region
      _
    $region9: #{actor_critic_evaluate.1} parent=1 // pred_fallthru
      _
    // Predicated region
    $region10: #{actor_critic_evaluate.1} parent=1 // pred_check
      _
    $region11: #{actor_critic_evaluate.1} parent=1 // pred_check_branch
      %38 = sbr.rel (0) target = $region13
    $region12: #{actor_critic_evaluate.1} parent=1 // pred_region
      _
    $region13: #{actor_critic_evaluate.1} parent=1 // pred_fallthru
      _
    // Predicated region
    $region14: #{actor_critic_evaluate.1} parent=1 // pred_check
      _
    $region15: #{actor_critic_evaluate.1} parent=1 // pred_check_branch
      %40 = sbr.rel (0) target = $region17
    $region16: #{actor_critic_evaluate.1} parent=1 // pred_region
      _
    $region17: #{actor_critic_evaluate.1} parent=1 // pred_fallthru
      _
    // Predicated region
    $region18: #{actor_critic_evaluate.1} parent=1 // pred_check
      _
    $region19: #{actor_critic_evaluate.1} parent=1 // pred_check_branch
      %42 = sbr.rel (0) target = $region21
    $region20: #{actor_critic_evaluate.1} parent=1 // pred_region
      _
    $region21: #{actor_critic_evaluate.1} parent=1 // pred_fallthru
      _
    // Predicated region
    $region22: #{actor_critic_evaluate.1} parent=1 // pred_check
      _
    $region23: #{actor_critic_evaluate.1} parent=1 // pred_check_branch
      %44 = sbr.rel (0) target = $region25
    $region24: #{actor_critic_evaluate.1} parent=1 // pred_region
      %s46 = ssub.s32 16, 16
      %47 = vsyncadd [#allocation4], %s46
      %s49 = sshll.u32 [#allocation3], 4
      %s50 = int_to_ptr.vmem [resolvable:$true] %s49
      %52 = dma.hbm_to_vmem [thread:$0]  %s5, 16, %s50, [#allocation4]
    $region25: #{actor_critic_evaluate.1} parent=1 // pred_fallthru
      _
    // Predicated region
    $region26: #{actor_critic_evaluate.1} parent=1 // pred_check
      _
    $region27: #{actor_critic_evaluate.1} parent=1 // pred_check_branch
      %54 = sbr.rel (0) target = $region29
    $region28: #{actor_critic_evaluate.1} parent=1 // pred_region
      _
    $region29: #{actor_critic_evaluate.1} parent=1 // pred_fallthru
      _
    // Predicated region
    $region30: #{actor_critic_evaluate.1} parent=1 // pred_check
      _
    $region31: #{actor_critic_evaluate.1} parent=1 // pred_check_branch
      %56 = sbr.rel (0) target = $region33
    $region32: #{actor_critic_evaluate.1} parent=1 // pred_region
      %s58 = ssub.s32 16, 16
      %59 = vsyncadd [#allocation6], %s58
      %s61 = sshll.u32 [#allocation5], 4
      %s62 = int_to_ptr.vmem [resolvable:$true] %s61
      %64 = dma.hbm_to_vmem [thread:$0]  %s7, 16, %s62, [#allocation6]
    $region33: #{actor_critic_evaluate.1} parent=1 // pred_fallthru
      _
    // Predicated region
    $region34: #{actor_critic_evaluate.1} parent=1 // pred_check
      _
    $region35: #{actor_critic_evaluate.1} parent=1 // pred_check_branch
      %66 = sbr.rel (0) target = $region37
    $region36: #{actor_critic_evaluate.1} parent=1 // pred_region
      _
    $region37: #{actor_critic_evaluate.1} parent=1 // pred_fallthru
      _
    // Predicated region
    $region38: #{actor_critic_evaluate.1} parent=1 // pred_check
      _
    $region39: #{actor_critic_evaluate.1} parent=1 // pred_check_branch
      %68 = sbr.rel (0) target = $region41
    $region40: #{actor_critic_evaluate.1} parent=1 // pred_region
      %s70 = ssub.s32 64, 64
      %71 = vsyncadd [#allocation6], %s70
      %s73 = sshll.u32 [#allocation7], 4
      %s74 = int_to_ptr.vmem [resolvable:$true] %s73
      %76 = dma.hbm_to_vmem [thread:$0]  %s9, 64, %s74, [#allocation6]
    $region41: #{actor_critic_evaluate.1} parent=1 // pred_fallthru
      _
    // Predicated region
    $region42: #{actor_critic_evaluate.1} parent=1 // pred_check
      _
    $region43: #{actor_critic_evaluate.1} parent=1 // pred_check_branch
      %78 = sbr.rel (0) target = $region45
    $region44: #{actor_critic_evaluate.1} parent=1 // pred_region
      _
    $region45: #{actor_critic_evaluate.1} parent=1 // pred_fallthru
      _
    // Predicated region
    $region46: #{actor_critic_evaluate.1} parent=1 // pred_check
      _
    $region47: #{actor_critic_evaluate.1} parent=1 // pred_check_branch
      %80 = sbr.rel (0) target = $region49
    $region48: #{actor_critic_evaluate.1} parent=1 // pred_region
      %s82 = ssub.s32 64, 64
      %83 = vsyncadd [#allocation9], %s82
      %s85 = sshll.u32 [#allocation8], 4
      %s86 = int_to_ptr.vmem [resolvable:$true] %s85
      %88 = dma.hbm_to_vmem [thread:$0]  %s11, 64, %s86, [#allocation9]
    $region49: #{actor_critic_evaluate.1} parent=1 // pred_fallthru
      _
    // Predicated region
    $region50: #{actor_critic_evaluate.1} parent=1 // pred_check
      _
    $region51: #{actor_critic_evaluate.1} parent=1 // pred_check_branch
      %90 = sbr.rel (0) target = $region53
    $region52: #{actor_critic_evaluate.1} parent=1 // pred_region
      _
    $region53: #{actor_critic_evaluate.1} parent=1 // pred_fallthru
      _
    // Predicated region
    $region54: #{actor_critic_evaluate.1} parent=1 // pred_check
      _
    $region55: #{actor_critic_evaluate.1} parent=1 // pred_check_branch
      %92 = sbr.rel (0) target = $region57
    $region56: #{actor_critic_evaluate.1} parent=1 // pred_region
      %s94 = ssub.s32 48, 48
      %95 = vsyncadd [#allocation9], %s94
      %s97 = sshll.u32 [#allocation10], 4
      %s98 = int_to_ptr.vmem [resolvable:$true] %s97
      %100 = dma.hbm_to_vmem [thread:$0]  %s13, 48, %s98, [#allocation9]
    $region57: #{actor_critic_evaluate.1} parent=1 // pred_fallthru
      _
    // Predicated region
    $region58: #{actor_critic_evaluate.1} parent=1 // pred_check
      _
    $region59: #{actor_critic_evaluate.1} parent=1 // pred_check_branch
      %102 = sbr.rel (0) target = $region61
    $region60: #{actor_critic_evaluate.1} parent=1 // pred_region
      %s104 = ssub.s32 9600, 9600
      %105 = vsyncadd [#allocation12], %s104
      %s106 = sshll.u32 [#allocation11], 4
      %s107 = int_to_ptr.vmem [resolvable:$true] %s106
      %112 = dma.hbm_to_vmem [thread:$0]  %s14, 9600, %s107, [#allocation12], 192, 192, 12
    $region61: #{actor_critic_evaluate.1} parent=1 // pred_fallthru
      _
    // Predicated region
    $region62: #{actor_critic_evaluate.1} parent=1 // pred_check
      _
    $region63: #{actor_critic_evaluate.1} parent=1 // pred_check_branch
      %114 = sbr.rel (0) target = $region65
    $region64: #{actor_critic_evaluate.1} parent=1 // pred_region
      %s116 = ssub.s32 48, 48
      %117 = vsyncadd [#allocation12], %s116
      %s119 = sshll.u32 [#allocation13], 4
      %s120 = int_to_ptr.vmem [resolvable:$true] %s119
      %122 = dma.hbm_to_vmem [thread:$0]  %s15, 48, %s120, [#allocation12]
    $region65: #{actor_critic_evaluate.1} parent=1 // pred_fallthru
      _
    // Predicated region
    $region66: #{actor_critic_evaluate.1} parent=1 // pred_check
      _
    $region67: #{actor_critic_evaluate.1} parent=1 // pred_check_branch
      %124 = sbr.rel (0) target = $region69
    $region68: #{actor_critic_evaluate.1} parent=1 // pred_region
      %s126 = ssub.s32 2432, 2432
      %127 = vsyncadd [#allocation15], %s126
      %s128 = sshll.u32 [#allocation14], 4
      %s129 = int_to_ptr.vmem [resolvable:$true] %s128
      %134 = dma.hbm_to_vmem [thread:$0]  %s16, 2432, %s129, [#allocation15], 64, 64, 4
    $region69: #{actor_critic_evaluate.1} parent=1 // pred_fallthru
      _
    // Predicated region
    $region70: #{actor_critic_evaluate.1} parent=1 // pred_check
      _
    $region71: #{actor_critic_evaluate.1} parent=1 // pred_check_branch
      %136 = sbr.rel (0) target = $region73
    $region72: #{actor_critic_evaluate.1} parent=1 // pred_region
      %s138 = ssub.s32 16, 16
      %139 = vsyncadd [#allocation15], %s138
      %s141 = sshll.u32 [#allocation16], 4
      %s142 = int_to_ptr.vmem [resolvable:$true] %s141
      %144 = dma.hbm_to_vmem [thread:$0]  %s17, 16, %s142, [#allocation15]
    $region73: #{actor_critic_evaluate.1} parent=1 // pred_fallthru
      _
    // Predicated region
    $region74: #{actor_critic_evaluate.1} parent=1 // pred_check
      _
    $region75: #{actor_critic_evaluate.1} parent=1 // pred_check_branch
      %146 = sbr.rel (0) target = $region77
    $region76: #{actor_critic_evaluate.1} parent=1 // pred_region
      %s148 = ssub.s32 48, 48
      %149 = vsyncadd [#allocation18], %s148
      %s151 = sshll.u32 [#allocation17], 4
      %s152 = int_to_ptr.vmem [resolvable:$true] %s151
      %154 = dma.hbm_to_vmem [thread:$0]  %s18, 48, %s152, [#allocation18]
    $region77: #{actor_critic_evaluate.1} parent=1 // pred_fallthru
      _
    // Predicated region
    $region78: #{actor_critic_evaluate.1} parent=1 // pred_check
      _
    $region79: #{actor_critic_evaluate.1} parent=1 // pred_check_branch
      %156 = sbr.rel (0) target = $region81
    $region80: #{actor_critic_evaluate.1} parent=1 // pred_region
      _
    $region81: #{actor_critic_evaluate.1} parent=1 // pred_fallthru
      _
    // Predicated region
    $region82: #{actor_critic_evaluate.1} parent=1 // pred_check
      _
    $region83: #{actor_critic_evaluate.1} parent=1 // pred_check_branch
      %158 = sbr.rel (0) target = $region85
    $region84: #{actor_critic_evaluate.1} parent=1 // pred_region
      %159 = dma.done [#allocation4], 16
    $region85: #{actor_critic_evaluate.1} parent=1 // pred_fallthru
      _
    // Predicated region
    $region86: #{actor_critic_evaluate.1} parent=1 // pred_check
      _
    $region87: #{actor_critic_evaluate.1} parent=1 // pred_check_branch
      %161 = sbr.rel (0) target = $region89
    $region88: #{actor_critic_evaluate.1} parent=1 // pred_region
      %162 = dma.done [#allocation6], 16
    $region89: #{actor_critic_evaluate.1} parent=1 // pred_fallthru
      _
    // Predicated region
    $region90: #{actor_critic_evaluate.1} parent=1 // pred_check
      _
    $region91: #{actor_critic_evaluate.1} parent=1 // pred_check_branch
      %164 = sbr.rel (0) target = $region93
    $region92: #{actor_critic_evaluate.1} parent=1 // pred_region
      %165 = dma.done [#allocation6], 64
    $region93: #{actor_critic_evaluate.1} parent=1 // pred_fallthru
      _
    // Predicated region
    $region94: #{actor_critic_evaluate.1} parent=1 // pred_check
      _
    $region95: #{actor_critic_evaluate.1} parent=1 // pred_check_branch
      %167 = sbr.rel (0) target = $region97
    $region96: #{actor_critic_evaluate.1} parent=1 // pred_region
      %168 = dma.done [#allocation9], 64
    $region97: #{actor_critic_evaluate.1} parent=1 // pred_fallthru
      _
    // Predicated region
    $region98: #{actor_critic_evaluate.1} parent=1 // pred_check
      _
    $region99: #{actor_critic_evaluate.1} parent=1 // pred_check_branch
      %170 = sbr.rel (0) target = $region101
    $region100: #{actor_critic_evaluate.1} parent=1 // pred_region
      %171 = dma.done [#allocation9], 48
    $region101: #{actor_critic_evaluate.1} parent=1 // pred_fallthru
      _
    // Predicated region
    $region102: #{actor_critic_evaluate.1} parent=1 // pred_check
      _
    $region103: #{actor_critic_evaluate.1} parent=1 // pred_check_branch
      %173 = sbr.rel (0) target = $region105
    $region104: #{actor_critic_evaluate.1} parent=1 // pred_region
      %174 = dma.done [#allocation12], 9600
    $region105: #{actor_critic_evaluate.1} parent=1 // pred_fallthru
      _
    // Predicated region
    $region106: #{actor_critic_evaluate.1} parent=1 // pred_check
      _
    $region107: #{actor_critic_evaluate.1} parent=1 // pred_check_branch
      %176 = sbr.rel (0) target = $region109
    $region108: #{actor_critic_evaluate.1} parent=1 // pred_region
      %177 = dma.done [#allocation12], 48
    $region109: #{actor_critic_evaluate.1} parent=1 // pred_fallthru
      _
    // Predicated region
    $region110: #{actor_critic_evaluate.1} parent=1 // pred_check
      _
    $region111: #{actor_critic_evaluate.1} parent=1 // pred_check_branch
      %179 = sbr.rel (0) target = $region113
    $region112: #{actor_critic_evaluate.1} parent=1 // pred_region
      %180 = dma.done [#allocation15], 2432
    $region113: #{actor_critic_evaluate.1} parent=1 // pred_fallthru
      _
    // Predicated region
    $region114: #{actor_critic_evaluate.1} parent=1 // pred_check
      _
    $region115: #{actor_critic_evaluate.1} parent=1 // pred_check_branch
      %182 = sbr.rel (0) target = $region117
    $region116: #{actor_critic_evaluate.1} parent=1 // pred_region
      %183 = dma.done [#allocation15], 16
    $region117: #{actor_critic_evaluate.1} parent=1 // pred_fallthru
      _
    // Predicated region
    $region118: #{actor_critic_evaluate.1} parent=1 // pred_check
      _
    $region119: #{actor_critic_evaluate.1} parent=1 // pred_check_branch
      %185 = sbr.rel (0) target = $region121
    $region120: #{actor_critic_evaluate.1} parent=1 // pred_region
      %186 = dma.done [#allocation18], 48
    $region121: #{actor_critic_evaluate.1} parent=1 // pred_fallthru
      _
    %v188 = vld [vmem:[%s1] sm:$0xff]
    %v189 = vld [vmem:[%s1 + $0x8] sm:$0xff]
    %v190 = vld [vmem:[%s0] sm:$0xff]
    %vm191 = vcmask 64512
    %v193 = vsel %vm191, %v190, 0
    %195 = vmatprep.subr.mxu0 0.0
    %196 = vmatpush1.msra.mxu0 %v188
    %197 = vmatprep.subr.mxu0 0.0
    %198 = vmatpush1.msra.mxu0 0.0
    %199 = vmatprep.subr.mxu0 0.0
    %200 = vmatpush1.msra.mxu0 0.0
    %201 = vmatprep.subr.mxu0 0.0
    %202 = vmatpush1.msra.mxu0 0.0
    %203 = vmatprep.subr.mxu0 0.0
    %204 = vmatpush1.msra.mxu0 0.0
    %205 = vmatprep.subr.mxu0 0.0
    %206 = vmatpush1.msra.mxu0 0.0
    %207 = vmatprep.subr.mxu0 0.0
    %208 = vmatpush1.msra.mxu0 0.0
    %209 = vmatprep.subr.mxu0 0.0
    %210 = vmatpush1.msra.mxu0 0.0
    %211 = vmatprep.subr.mxu0 0.0
    %212 = vmatpush1.msra.mxu0 0.0
    %213 = vmatprep.subr.mxu0 0.0
    %214 = vmatpush1.msra.mxu0 0.0
    %215 = vmatprep.subr.mxu0 0.0
    %216 = vmatpush1.msra.mxu0 0.0
    %217 = vmatprep.subr.mxu0 0.0
    %218 = vmatpush1.msra.mxu0 0.0
    %219 = vmatprep.subr.mxu0 0.0
    %220 = vmatpush1.msra.mxu0 0.0
    %221 = vmatprep.subr.mxu0 0.0
    %222 = vmatpush1.msra.mxu0 0.0
    %223 = vmatprep.subr.mxu0 0.0
    %224 = vmatpush1.msra.mxu0 0.0
    %225 = vmatprep.subr.mxu0 0.0
    %226 = vmatpush1.msra.mxu0 0.0
    %227 = vmatprep.subr.mxu0 0.0
    %228 = vmatpush1.msra.mxu0 0.0
    %229 = vmatprep.subr.mxu0 0.0
    %230 = vmatpush1.msra.mxu0 0.0
    %231 = vmatprep.subr.mxu0 0.0
    %232 = vmatpush1.msra.mxu0 0.0
    %233 = vmatprep.subr.mxu0 0.0
    %234 = vmatpush1.msra.mxu0 0.0
    %235 = vmatprep.subr.mxu0 0.0
    %236 = vmatpush1.msra.mxu0 0.0
    %237 = vmatprep.subr.mxu0 0.0
    %238 = vmatpush1.msra.mxu0 0.0
    %239 = vmatprep.subr.mxu0 0.0
    %240 = vmatpush1.msra.mxu0 0.0
    %241 = vmatprep.subr.mxu0 0.0
    %242 = vmatpush1.msra.mxu0 0.0
    %243 = vmatprep.subr.mxu0 0.0
    %244 = vmatpush1.msra.mxu0 0.0
    %245 = vmatprep.subr.mxu0 0.0
    %246 = vmatpush1.msra.mxu0 0.0
    %247 = vmatprep.subr.mxu0 0.0
    %248 = vmatpush1.msra.mxu0 0.0
    %249 = vmatprep.subr.mxu0 0.0
    %250 = vmatpush1.msra.mxu0 0.0
    %251 = vmatprep.subr.mxu0 0.0
    %252 = vmatpush1.msra.mxu0 0.0
    %253 = vmatprep.subr.mxu0 0.0
    %254 = vmatpush1.msra.mxu0 0.0
    %255 = vmatprep.subr.mxu0 0.0
    %256 = vmatpush1.msra.mxu0 0.0
    %257 = vmatprep.subr.mxu0 0.0
    %258 = vmatpush1.msra.mxu0 0.0
    %259 = vmatprep.mubr.f32.mxu0 0.0
    %260 = vmatmul.mubr.f32.gmra.mrb[0].mxu0 %v193
    %v261 = vpop.f32.mrb[0].mxu0
    %v262 = vadd.f32 0.0, %v261
    %v263 = vpop.f32.mrb[0].mxu0
    %264 = vdwg.mxu0
    %s265 = scalar_lea.vmem %s0, 8
    %v266 = vld [vmem:[%s265] sm:$0xff]
    %v268 = vsel %vm191, %v266, 0
    %270 = vmatprep.subr.mxu0 0.0
    %271 = vmatpush1.msra.mxu0 %v189
    %272 = vmatprep.subr.mxu0 0.0
    %273 = vmatpush1.msra.mxu0 0.0
    %274 = vmatprep.subr.mxu0 0.0
    %275 = vmatpush1.msra.mxu0 0.0
    %276 = vmatprep.subr.mxu0 0.0
    %277 = vmatpush1.msra.mxu0 0.0
    %278 = vmatprep.subr.mxu0 0.0
    %279 = vmatpush1.msra.mxu0 0.0
    %280 = vmatprep.subr.mxu0 0.0
    %281 = vmatpush1.msra.mxu0 0.0
    %282 = vmatprep.subr.mxu0 0.0
    %283 = vmatpush1.msra.mxu0 0.0
    %284 = vmatprep.subr.mxu0 0.0
    %285 = vmatpush1.msra.mxu0 0.0
    %286 = vmatprep.subr.mxu0 0.0
    %287 = vmatpush1.msra.mxu0 0.0
    %288 = vmatprep.subr.mxu0 0.0
    %289 = vmatpush1.msra.mxu0 0.0
    %290 = vmatprep.subr.mxu0 0.0
    %291 = vmatpush1.msra.mxu0 0.0
    %292 = vmatprep.subr.mxu0 0.0
    %293 = vmatpush1.msra.mxu0 0.0
    %294 = vmatprep.subr.mxu0 0.0
    %295 = vmatpush1.msra.mxu0 0.0
    %296 = vmatprep.subr.mxu0 0.0
    %297 = vmatpush1.msra.mxu0 0.0
    %298 = vmatprep.subr.mxu0 0.0
    %299 = vmatpush1.msra.mxu0 0.0
    %300 = vmatprep.subr.mxu0 0.0
    %301 = vmatpush1.msra.mxu0 0.0
    %302 = vmatprep.subr.mxu0 0.0
    %303 = vmatpush1.msra.mxu0 0.0
    %304 = vmatprep.subr.mxu0 0.0
    %305 = vmatpush1.msra.mxu0 0.0
    %306 = vmatprep.subr.mxu0 0.0
    %307 = vmatpush1.msra.mxu0 0.0
    %308 = vmatprep.subr.mxu0 0.0
    %309 = vmatpush1.msra.mxu0 0.0
    %310 = vmatprep.subr.mxu0 0.0
    %311 = vmatpush1.msra.mxu0 0.0
    %312 = vmatprep.subr.mxu0 0.0
    %313 = vmatpush1.msra.mxu0 0.0
    %314 = vmatprep.subr.mxu0 0.0
    %315 = vmatpush1.msra.mxu0 0.0
    %316 = vmatprep.subr.mxu0 0.0
    %317 = vmatpush1.msra.mxu0 0.0
    %318 = vmatprep.subr.mxu0 0.0
    %319 = vmatpush1.msra.mxu0 0.0
    %320 = vmatprep.subr.mxu0 0.0
    %321 = vmatpush1.msra.mxu0 0.0
    %322 = vmatprep.subr.mxu0 0.0
    %323 = vmatpush1.msra.mxu0 0.0
    %324 = vmatprep.subr.mxu0 0.0
    %325 = vmatpush1.msra.mxu0 0.0
    %326 = vmatprep.subr.mxu0 0.0
    %327 = vmatpush1.msra.mxu0 0.0
    %328 = vmatprep.subr.mxu0 0.0
    %329 = vmatpush1.msra.mxu0 0.0
    %330 = vmatprep.subr.mxu0 0.0
    %331 = vmatpush1.msra.mxu0 0.0
    %332 = vmatprep.subr.mxu0 0.0
    %333 = vmatpush1.msra.mxu0 0.0
    %334 = vmatprep.mubr.f32.mxu0 0.0
    %335 = vmatmul.mubr.f32.gmra.mrb[0].mxu0 %v268
    %v336 = vpop.f32.mrb[0].mxu0
    %v337 = vadd.f32 0.0, %v336
    %v338 = vpop.f32.mrb[0].mxu0
    %339 = vdwg.mxu0
    %v340 = vld [vmem:[%s4] sm:$0xf]
    %v341 = vld [vmem:[%s4 + $0x4] sm:$0xf]
    %v342 = vpack.c.bf16 %v337, %v262
    %v343 = vld [vmem:[#allocation3] sm:$0x1]
    %v345 = vlaneseq
    %v346 = vshrl.u32 %v345, 7
    %v347 = vsub.s32 0, %v346
    %v348 = vrot.slane %v343, %v347
    %v352 = vunpack.c.l.b16 %v340
    %v353 = vunpack.c.l.b16 %v341
    %v354 = vpack.c.b16 %v353, %v352
    %vm356 = vcmask 130048
    %v358 = vsel %vm356, %v342, 0
    %360 = vmatprep.subr.bf16.mxu0 0
    %361 = vmatpush1.bf16.msra.mxu0 %v354
    %362 = vmatprep.subr.bf16.mxu0 0
    %363 = vmatpush1.bf16.msra.mxu0 0
    %364 = vmatprep.subr.bf16.mxu0 0
    %365 = vmatpush1.bf16.msra.mxu0 0
    %366 = vmatprep.subr.bf16.mxu0 0
    %367 = vmatpush1.bf16.msra.mxu0 0
    %368 = vmatprep.subr.bf16.mxu0 0
    %369 = vmatpush1.bf16.msra.mxu0 0
    %370 = vmatprep.subr.bf16.mxu0 0
    %371 = vmatpush1.bf16.msra.mxu0 0
    %372 = vmatprep.subr.bf16.mxu0 0
    %373 = vmatpush1.bf16.msra.mxu0 0
    %374 = vmatprep.subr.bf16.mxu0 0
    %375 = vmatpush1.bf16.msra.mxu0 0
    %376 = vmatprep.subr.bf16.mxu0 0
    %377 = vmatpush1.bf16.msra.mxu0 0
    %378 = vmatprep.subr.bf16.mxu0 0
    %379 = vmatpush1.bf16.msra.mxu0 0
    %380 = vmatprep.subr.bf16.mxu0 0
    %381 = vmatpush1.bf16.msra.mxu0 0
    %382 = vmatprep.subr.bf16.mxu0 0
    %383 = vmatpush1.bf16.msra.mxu0 0
    %384 = vmatprep.subr.bf16.mxu0 0
    %385 = vmatpush1.bf16.msra.mxu0 0
    %386 = vmatprep.subr.bf16.mxu0 0
    %387 = vmatpush1.bf16.msra.mxu0 0
    %388 = vmatprep.subr.bf16.mxu0 0
    %389 = vmatpush1.bf16.msra.mxu0 0
    %390 = vmatprep.subr.bf16.mxu0 0
    %391 = vmatpush1.bf16.msra.mxu0 0
    %392 = vmatprep.mubr.bf16.mxu0 0
    %393 = vmatmul.mubr.bf16.gmra.mrb[0].mxu0 %v358
    %v394 = vpop.f32.mrb[0].mxu0
    %v395 = vadd.f32 %v348, %v394
    %v396 = vpop.f32.mrb[0].mxu0
    %v397 = vpop.f32.mrb[0].mxu0
    %v398 = vadd.f32 %v348, %v397
    %v399 = vpop.f32.mrb[0].mxu0
    %400 = vdwg.mxu0
    %v401 = vmax.f32 %v395, 0.0
    %v402 = vmax.f32 %v398, 0.0
    %403 = vmatprep.subr.mxu0 0.0
    %404 = vmatpush1.msra.mxu0 %v401
    %405 = vmatprep.subr.mxu0 0.0
    %406 = vmatpush1.msra.mxu0 0.0
    %407 = vmatprep.subr.mxu0 0.0
    %408 = vmatpush1.msra.mxu0 0.0
    %409 = vmatprep.subr.mxu0 0.0
    %410 = vmatpush1.msra.mxu0 0.0
    %411 = vmatprep.subr.mxu0 0.0
    %412 = vmatpush1.msra.mxu0 0.0
    %413 = vmatprep.subr.mxu0 0.0
    %414 = vmatpush1.msra.mxu0 0.0
    %415 = vmatprep.subr.mxu0 0.0
    %416 = vmatpush1.msra.mxu0 0.0
    %417 = vmatprep.subr.mxu0 0.0
    %418 = vmatpush1.msra.mxu0 0.0
    %419 = vmatprep.subr.mxu0 0.0
    %420 = vmatpush1.msra.mxu0 0.0
    %421 = vmatprep.subr.mxu0 0.0
    %422 = vmatpush1.msra.mxu0 0.0
    %423 = vmatprep.subr.mxu0 0.0
    %424 = vmatpush1.msra.mxu0 0.0
    %425 = vmatprep.subr.mxu0 0.0
    %426 = vmatpush1.msra.mxu0 0.0
    %427 = vmatprep.subr.mxu0 0.0
    %428 = vmatpush1.msra.mxu0 0.0
    %429 = vmatprep.subr.mxu0 0.0
    %430 = vmatpush1.msra.mxu0 0.0
    %431 = vmatprep.subr.mxu0 0.0
    %432 = vmatpush1.msra.mxu0 0.0
    %433 = vmatprep.subr.mxu0 0.0
    %434 = vmatpush1.msra.mxu0 0.0
    %435 = vmatprep.subr.mxu0 0.0
    %436 = vmatpush1.msra.mxu0 0.0
    %437 = vmatprep.subr.mxu0 0.0
    %438 = vmatpush1.msra.mxu0 0.0
    %439 = vmatprep.subr.mxu0 0.0
    %440 = vmatpush1.msra.mxu0 0.0
    %441 = vmatprep.subr.mxu0 0.0
    %442 = vmatpush1.msra.mxu0 0.0
    %443 = vmatprep.subr.mxu0 0.0
    %444 = vmatpush1.msra.mxu0 0.0
    %445 = vmatprep.subr.mxu0 0.0
    %446 = vmatpush1.msra.mxu0 0.0
    %447 = vmatprep.subr.mxu0 0.0
    %448 = vmatpush1.msra.mxu0 0.0
    %449 = vmatprep.subr.mxu0 0.0
    %450 = vmatpush1.msra.mxu0 0.0
    %451 = vmatprep.subr.mxu0 0.0
    %452 = vmatpush1.msra.mxu0 0.0
    %453 = vmatprep.subr.mxu0 0.0
    %454 = vmatpush1.msra.mxu0 0.0
    %455 = vmatprep.subr.mxu0 0.0
    %456 = vmatpush1.msra.mxu0 0.0
    %457 = vmatprep.subr.mxu0 0.0
    %458 = vmatpush1.msra.mxu0 0.0
    %459 = vmatprep.subr.mxu0 0.0
    %460 = vmatpush1.msra.mxu0 0.0
    %461 = vmatprep.subr.mxu0 0.0
    %462 = vmatpush1.msra.mxu0 0.0
    %463 = vmatprep.subr.mxu0 0.0
    %464 = vmatpush1.msra.mxu0 0.0
    %465 = vmatprep.subr.mxu0 0.0
    %466 = vmatpush1.msra.mxu0 0.0
    %467 = vmatprep.mubr.f32.mxu0 0.0
    %468 = vmatmul.mubr.f32.gmra.mrb[0].mxu0 %v193
    %v469 = vpop.f32.mrb[0].mxu0
    %v470 = vadd.f32 0.0, %v469
    %v471 = vpop.f32.mrb[0].mxu0
    %472 = vdwg.mxu0
    %473 = vmatprep.subr.mxu0 0.0
    %474 = vmatpush1.msra.mxu0 %v402
    %475 = vmatprep.subr.mxu0 0.0
    %476 = vmatpush1.msra.mxu0 0.0
    %477 = vmatprep.subr.mxu0 0.0
    %478 = vmatpush1.msra.mxu0 0.0
    %479 = vmatprep.subr.mxu0 0.0
    %480 = vmatpush1.msra.mxu0 0.0
    %481 = vmatprep.subr.mxu0 0.0
    %482 = vmatpush1.msra.mxu0 0.0
    %483 = vmatprep.subr.mxu0 0.0
    %484 = vmatpush1.msra.mxu0 0.0
    %485 = vmatprep.subr.mxu0 0.0
    %486 = vmatpush1.msra.mxu0 0.0
    %487 = vmatprep.subr.mxu0 0.0
    %488 = vmatpush1.msra.mxu0 0.0
    %489 = vmatprep.subr.mxu0 0.0
    %490 = vmatpush1.msra.mxu0 0.0
    %491 = vmatprep.subr.mxu0 0.0
    %492 = vmatpush1.msra.mxu0 0.0
    %493 = vmatprep.subr.mxu0 0.0
    %494 = vmatpush1.msra.mxu0 0.0
    %495 = vmatprep.subr.mxu0 0.0
    %496 = vmatpush1.msra.mxu0 0.0
    %497 = vmatprep.subr.mxu0 0.0
    %498 = vmatpush1.msra.mxu0 0.0
    %499 = vmatprep.subr.mxu0 0.0
    %500 = vmatpush1.msra.mxu0 0.0
    %501 = vmatprep.subr.mxu0 0.0
    %502 = vmatpush1.msra.mxu0 0.0
    %503 = vmatprep.subr.mxu0 0.0
    %504 = vmatpush1.msra.mxu0 0.0
    %505 = vmatprep.subr.mxu0 0.0
    %506 = vmatpush1.msra.mxu0 0.0
    %507 = vmatprep.subr.mxu0 0.0
    %508 = vmatpush1.msra.mxu0 0.0
    %509 = vmatprep.subr.mxu0 0.0
    %510 = vmatpush1.msra.mxu0 0.0
    %511 = vmatprep.subr.mxu0 0.0
    %512 = vmatpush1.msra.mxu0 0.0
    %513 = vmatprep.subr.mxu0 0.0
    %514 = vmatpush1.msra.mxu0 0.0
    %515 = vmatprep.subr.mxu0 0.0
    %516 = vmatpush1.msra.mxu0 0.0
    %517 = vmatprep.subr.mxu0 0.0
    %518 = vmatpush1.msra.mxu0 0.0
    %519 = vmatprep.subr.mxu0 0.0
    %520 = vmatpush1.msra.mxu0 0.0
    %521 = vmatprep.subr.mxu0 0.0
    %522 = vmatpush1.msra.mxu0 0.0
    %523 = vmatprep.subr.mxu0 0.0
    %524 = vmatpush1.msra.mxu0 0.0
    %525 = vmatprep.subr.mxu0 0.0
    %526 = vmatpush1.msra.mxu0 0.0
    %527 = vmatprep.subr.mxu0 0.0
    %528 = vmatpush1.msra.mxu0 0.0
    %529 = vmatprep.subr.mxu0 0.0
    %530 = vmatpush1.msra.mxu0 0.0
    %531 = vmatprep.subr.mxu0 0.0
    %532 = vmatpush1.msra.mxu0 0.0
    %533 = vmatprep.subr.mxu0 0.0
    %534 = vmatpush1.msra.mxu0 0.0
    %535 = vmatprep.subr.mxu0 0.0
    %536 = vmatpush1.msra.mxu0 0.0
    %537 = vmatprep.mubr.f32.mxu0 0.0
    %538 = vmatmul.mubr.f32.gmra.mrb[0].mxu0 %v268
    %v539 = vpop.f32.mrb[0].mxu0
    %v540 = vadd.f32 0.0, %v539
    %v541 = vpop.f32.mrb[0].mxu0
    %542 = vdwg.mxu0
    %v543 = vld [vmem:[%s6] sm:$0xf]
    %v544 = vld [vmem:[%s6 + $0x4] sm:$0xf]
    %v545 = vld [vmem:[%s6 + $0x8] sm:$0xf]
    %v546 = vld [vmem:[%s6 + $0xc] sm:$0xf]
    %v547 = vld [vmem:[%s6 + $0x10] sm:$0xf]
    %v548 = vld [vmem:[%s6 + $0x14] sm:$0xf]
    %v549 = vld [vmem:[%s6 + $0x18] sm:$0xf]
    %v550 = vld [vmem:[%s6 + $0x1c] sm:$0xf]
    %v551 = vld [vmem:[%s6 + $0x20] sm:$0xf]
    %v552 = vld [vmem:[%s6 + $0x24] sm:$0xf]
    %v553 = vld [vmem:[%s6 + $0x28] sm:$0xf]
    %v554 = vld [vmem:[%s6 + $0x2c] sm:$0xf]
    %v555 = vld [vmem:[%s6 + $0x30] sm:$0x3]
    %v556 = vpack.c.bf16 %v540, %v470
    %v557 = vld [vmem:[#allocation5] sm:$0x1]
    %v559 = vlaneseq
    %v560 = vshrl.u32 %v559, 7
    %v561 = vsub.s32 0, %v560
    %v562 = vrot.slane %v557, %v561
    %v577 = vunpack.c.l.b16 %v543
    %v578 = vunpack.c.l.b16 %v544
    %v579 = vunpack.c.l.b16 %v545
    %v580 = vunpack.c.l.b16 %v546
    %v581 = vunpack.c.l.b16 %v547
    %v582 = vunpack.c.l.b16 %v548
    %v583 = vunpack.c.l.b16 %v549
    %v584 = vunpack.c.l.b16 %v550
    %v585 = vunpack.c.l.b16 %v551
    %v586 = vunpack.c.l.b16 %v552
    %v587 = vunpack.c.l.b16 %v553
    %v588 = vunpack.c.l.b16 %v554
    %v589 = vunpack.c.l.b16 %v555
    %v590 = vpack.c.b16 %v578, %v577
    %v591 = vpack.c.b16 %v580, %v579
    %v592 = vpack.c.b16 %v582, %v581
    %v593 = vpack.c.b16 %v584, %v583
    %v594 = vpack.c.b16 %v586, %v585
    %v595 = vpack.c.b16 %v588, %v587
    %v596 = vpack.c.b16 %v589, %v589
    %vm603 = vcmask 818176
    %v605 = vsel %vm603, %v556, 0
    %vm607 = vcmask 1041408
    %v609 = vsel %vm607, %v596, 0
    %611 = vmatprep.subr.bf16.mxu0 0
    %612 = vmatpush1.bf16.msra.mxu0 %v590
    %613 = vmatprep.subr.bf16.mxu0 0
    %614 = vmatpush1.bf16.msra.mxu0 %v591
    %615 = vmatprep.subr.bf16.mxu0 0
    %616 = vmatpush1.bf16.msra.mxu0 %v592
    %617 = vmatprep.subr.bf16.mxu0 0
    %618 = vmatpush1.bf16.msra.mxu0 %v593
    %619 = vmatprep.subr.bf16.mxu0 0
    %620 = vmatpush1.bf16.msra.mxu0 %v594
    %621 = vmatprep.subr.bf16.mxu0 0
    %622 = vmatpush1.bf16.msra.mxu0 %v595
    %623 = vmatprep.subr.bf16.mxu0 0
    %624 = vmatpush1.bf16.msra.mxu0 %v609
    %625 = vmatprep.subr.bf16.mxu0 0
    %626 = vmatpush1.bf16.msra.mxu0 0
    %627 = vmatprep.subr.bf16.mxu0 0
    %628 = vmatpush1.bf16.msra.mxu0 0
    %629 = vmatprep.subr.bf16.mxu0 0
    %630 = vmatpush1.bf16.msra.mxu0 0
    %631 = vmatprep.subr.bf16.mxu0 0
    %632 = vmatpush1.bf16.msra.mxu0 0
    %633 = vmatprep.subr.bf16.mxu0 0
    %634 = vmatpush1.bf16.msra.mxu0 0
    %635 = vmatprep.subr.bf16.mxu0 0
    %636 = vmatpush1.bf16.msra.mxu0 0
    %637 = vmatprep.subr.bf16.mxu0 0
    %638 = vmatpush1.bf16.msra.mxu0 0
    %639 = vmatprep.subr.bf16.mxu0 0
    %640 = vmatpush1.bf16.msra.mxu0 0
    %641 = vmatprep.subr.bf16.mxu0 0
    %642 = vmatpush1.bf16.msra.mxu0 0
    %643 = vmatprep.mubr.bf16.mxu0 0
    %644 = vmatmul.mubr.bf16.gmra.mrb[0].mxu0 %v605
    %v645 = vpop.f32.mrb[0].mxu0
    %v646 = vadd.f32 %v562, %v645
    %v647 = vpop.f32.mrb[0].mxu0
    %v648 = vpop.f32.mrb[0].mxu0
    %v649 = vadd.f32 %v562, %v648
    %v650 = vpop.f32.mrb[0].mxu0
    %651 = vdwg.mxu0
    %v652 = vsel %vm603, %v646, 0.0
    %v653 = vrot.slane %v652, 4
    %v654 = vadd.f32 %v652, %v653
    %v655 = vrot.slane %v654, 2
    %v656 = vadd.f32 %v654, %v655
    %v657 = vrot.slane %v656, 1
    %v658 = vadd.f32 %v656, %v657
    %v659 = vrcp.pop 8.0
    %v660 = vmul.f32 %v658, %v659
    %v661 = vsel %vm603, %v649, 0.0
    %v662 = vrot.slane %v661, 4
    %v663 = vadd.f32 %v661, %v662
    %v664 = vrot.slane %v663, 2
    %v665 = vadd.f32 %v663, %v664
    %v666 = vrot.slane %v665, 1
    %v667 = vadd.f32 %v665, %v666
    %v668 = vmul.f32 %v667, %v659
    %vm669 = vcmask 1040384
    %v670 = vsel %vm669, %v660, %v668
    %v671 = vld [vmem:[%s2] sm:$0x3]
    %673 = vrot.lane.b32.xlu0 %v671, 100
    %v674 = vpop.permute.xlu0 %673
    %v676 = vsel %vm603, %v670, %v674
    %v677 = vld [vmem:[%s8] sm:$0xff]
    %v678 = vld [vmem:[%s8 + $0x8] sm:$0xff]
    %v679 = vld [vmem:[%s8 + $0x10] sm:$0xff]
    %v680 = vld [vmem:[%s8 + $0x18] sm:$0xff]
    %v681 = vld [vmem:[%s8 + $0x20] sm:$0xff]
    %v682 = vld [vmem:[%s8 + $0x28] sm:$0xff]
    %v683 = vld [vmem:[%s8 + $0x30] sm:$0xff]
    %v684 = vld [vmem:[%s8 + $0x38] sm:$0xff]
    %v685 = vld [vmem:[%s8 + $0x40] sm:$0xff]
    %v686 = vld [vmem:[%s8 + $0x48] sm:$0xff]
    %v687 = vld [vmem:[%s8 + $0x50] sm:$0xff]
    %v688 = vld [vmem:[%s8 + $0x58] sm:$0xff]
    %v689 = vld [vmem:[%s8 + $0x60] sm:$0xff]
    %v690 = vld [vmem:[%s8 + $0x68] sm:$0xff]
    %v691 = vld [vmem:[%s8 + $0x70] sm:$0xff]
    %v692 = vld [vmem:[%s8 + $0x78] sm:$0xff]
    %v693 = vld [vmem:[%s8 + $0x80] sm:$0xff]
    %v694 = vld [vmem:[%s8 + $0x88] sm:$0xff]
    %v695 = vld [vmem:[%s8 + $0x90] sm:$0xff]
    %v696 = vld [vmem:[%s8 + $0x98] sm:$0xff]
    %v697 = vld [vmem:[%s8 + $0xa0] sm:$0xff]
    %v698 = vld [vmem:[%s8 + $0xa8] sm:$0xff]
    %v699 = vld [vmem:[%s8 + $0xb0] sm:$0xff]
    %v700 = vld [vmem:[%s8 + $0xb8] sm:$0xff]
    %v701 = vld [vmem:[%s8 + $0xc0] sm:$0xff]
    %v702 = vld [vmem:[%s8 + $0xc8] sm:$0xff]
    %v703 = vld [vmem:[%s8 + $0xd0] sm:$0x33]
    %v704 = vld [vmem:[%s8 + $0xd8] sm:$0x33]
    %v705 = vpack.c.bf16 %v676, %v676
    %v706 = vld [vmem:[#allocation7] sm:$0xf]
    %v708 = vlaneseq
    %v709 = vshrl.u32 %v708, 7
    %v710 = vsub.s32 0, %v709
    %v711 = vrot.slane %v706, %v710
    %v712 = vlaneseq
    %v713 = vshrl.u32 %v712, 7
    %v714 = vsub.s32 1, %v713
    %v715 = vrot.slane %v706, %v714
    %v716 = vlaneseq
    %v717 = vshrl.u32 %v716, 7
    %v718 = vsub.s32 2, %v717
    %v719 = vrot.slane %v706, %v718
    %v720 = vlaneseq
    %v721 = vshrl.u32 %v720, 7
    %v722 = vsub.s32 3, %v721
    %v723 = vrot.slane %v706, %v722
    %v756 = vunpack.c.l.b16 %v677
    %v757 = vunpack.c.h.b16 %v677
    %v758 = vunpack.c.l.b16 %v678
    %v759 = vunpack.c.h.b16 %v678
    %v760 = vunpack.c.l.b16 %v679
    %v761 = vunpack.c.h.b16 %v679
    %v762 = vunpack.c.l.b16 %v680
    %v763 = vunpack.c.h.b16 %v680
    %v764 = vunpack.c.l.b16 %v681
    %v765 = vunpack.c.h.b16 %v681
    %v766 = vunpack.c.l.b16 %v682
    %v767 = vunpack.c.h.b16 %v682
    %v768 = vunpack.c.l.b16 %v683
    %v769 = vunpack.c.h.b16 %v683
    %v770 = vunpack.c.l.b16 %v684
    %v771 = vunpack.c.h.b16 %v684
    %v772 = vunpack.c.l.b16 %v685
    %v773 = vunpack.c.h.b16 %v685
    %v774 = vunpack.c.l.b16 %v686
    %v775 = vunpack.c.h.b16 %v686
    %v776 = vunpack.c.l.b16 %v687
    %v777 = vunpack.c.h.b16 %v687
    %v778 = vunpack.c.l.b16 %v688
    %v779 = vunpack.c.h.b16 %v688
    %v780 = vunpack.c.l.b16 %v689
    %v781 = vunpack.c.h.b16 %v689
    %v782 = vunpack.c.l.b16 %v690
    %v783 = vunpack.c.h.b16 %v690
    %v784 = vunpack.c.l.b16 %v691
    %v785 = vunpack.c.h.b16 %v691
    %v786 = vunpack.c.l.b16 %v692
    %v787 = vunpack.c.h.b16 %v692
    %v788 = vunpack.c.l.b16 %v693
    %v789 = vunpack.c.h.b16 %v693
    %v790 = vunpack.c.l.b16 %v694
    %v791 = vunpack.c.h.b16 %v694
    %v792 = vunpack.c.l.b16 %v695
    %v793 = vunpack.c.h.b16 %v695
    %v794 = vunpack.c.l.b16 %v696
    %v795 = vunpack.c.h.b16 %v696
    %v796 = vunpack.c.l.b16 %v697
    %v797 = vunpack.c.h.b16 %v697
    %v798 = vunpack.c.l.b16 %v698
    %v799 = vunpack.c.h.b16 %v698
    %v800 = vunpack.c.l.b16 %v699
    %v801 = vunpack.c.h.b16 %v699
    %v802 = vunpack.c.l.b16 %v700
    %v803 = vunpack.c.h.b16 %v700
    %v804 = vunpack.c.l.b16 %v701
    %v805 = vunpack.c.h.b16 %v701
    %v806 = vunpack.c.l.b16 %v702
    %v807 = vunpack.c.h.b16 %v702
    %v808 = vunpack.c.l.b16 %v703
    %v809 = vunpack.c.h.b16 %v703
    %v810 = vunpack.c.l.b16 %v704
    %v811 = vunpack.c.h.b16 %v704
    %v812 = vpack.c.b16 %v760, %v756
    %v813 = vpack.c.b16 %v761, %v757
    %v814 = vpack.c.b16 %v762, %v758
    %v815 = vpack.c.b16 %v763, %v759
    %v816 = vpack.c.b16 %v768, %v764
    %v817 = vpack.c.b16 %v769, %v765
    %v818 = vpack.c.b16 %v770, %v766
    %v819 = vpack.c.b16 %v771, %v767
    %v820 = vpack.c.b16 %v776, %v772
    %v821 = vpack.c.b16 %v777, %v773
    %v822 = vpack.c.b16 %v778, %v774
    %v823 = vpack.c.b16 %v779, %v775
    %v824 = vpack.c.b16 %v784, %v780
    %v825 = vpack.c.b16 %v785, %v781
    %v826 = vpack.c.b16 %v786, %v782
    %v827 = vpack.c.b16 %v787, %v783
    %v828 = vpack.c.b16 %v792, %v788
    %v829 = vpack.c.b16 %v793, %v789
    %v830 = vpack.c.b16 %v794, %v790
    %v831 = vpack.c.b16 %v795, %v791
    %v832 = vpack.c.b16 %v800, %v796
    %v833 = vpack.c.b16 %v801, %v797
    %v834 = vpack.c.b16 %v802, %v798
    %v835 = vpack.c.b16 %v803, %v799
    %v836 = vpack.c.b16 %v808, %v804
    %v837 = vpack.c.b16 %v809, %v805
    %v838 = vpack.c.b16 %v810, %v806
    %v839 = vpack.c.b16 %v811, %v807
    %vm864 = vcmask 883712
    %v866 = vsel %vm864, %v705, 0
    %vm868 = vcmask 1045504
    %v870 = vsel %vm868, %v836, 0
    %v873 = vsel %vm868, %v837, 0
    %v876 = vsel %vm868, %v838, 0
    %v879 = vsel %vm868, %v839, 0
    %881 = vmatprep.subr.bf16.mxu0 %v813
    %882 = vmatpush1.bf16.msra.mxu0 %v812
    %883 = vmatprep.subr.bf16.mxu0 %v817
    %884 = vmatpush1.bf16.msra.mxu0 %v816
    %885 = vmatprep.subr.bf16.mxu0 %v821
    %886 = vmatpush1.bf16.msra.mxu0 %v820
    %887 = vmatprep.subr.bf16.mxu0 %v825
    %888 = vmatpush1.bf16.msra.mxu0 %v824
    %889 = vmatprep.subr.bf16.mxu0 %v829
    %890 = vmatpush1.bf16.msra.mxu0 %v828
    %891 = vmatprep.subr.bf16.mxu0 %v833
    %892 = vmatpush1.bf16.msra.mxu0 %v832
    %893 = vmatprep.subr.bf16.mxu0 %v873
    %894 = vmatpush1.bf16.msra.mxu0 %v870
    %895 = vmatprep.subr.bf16.mxu0 0
    %896 = vmatpush1.bf16.msra.mxu0 0
    %897 = vmatprep.subr.bf16.mxu0 0
    %898 = vmatpush1.bf16.msra.mxu0 0
    %899 = vmatprep.subr.bf16.mxu0 0
    %900 = vmatpush1.bf16.msra.mxu0 0
    %901 = vmatprep.subr.bf16.mxu0 0
    %902 = vmatpush1.bf16.msra.mxu0 0
    %903 = vmatprep.subr.bf16.mxu0 0
    %904 = vmatpush1.bf16.msra.mxu0 0
    %905 = vmatprep.subr.bf16.mxu0 0
    %906 = vmatpush1.bf16.msra.mxu0 0
    %907 = vmatprep.subr.bf16.mxu0 0
    %908 = vmatpush1.bf16.msra.mxu0 0
    %909 = vmatprep.subr.bf16.mxu0 0
    %910 = vmatpush1.bf16.msra.mxu0 0
    %911 = vmatprep.subr.bf16.mxu0 0
    %912 = vmatpush1.bf16.msra.mxu0 0
    %913 = vmatprep.mubr.bf16.mxu0 0
    %914 = vmatmul.mubr.bf16.gmra.mrb[0].mxu0 %v866
    %v915 = vpop.f32.mrb[0].mxu0
    %v916 = vadd.f32 %v711, %v915
    %v917 = vpop.f32.mrb[0].mxu0
    %v918 = vadd.f32 %v715, %v917
    %v919 = vpop.f32.mrb[0].mxu0
    %v920 = vpop.f32.mrb[0].mxu0
    %921 = vdwg.mxu0
    %922 = vmatprep.subr.bf16.mxu0 %v815
    %923 = vmatpush1.bf16.msra.mxu0 %v814
    %924 = vmatprep.subr.bf16.mxu0 %v819
    %925 = vmatpush1.bf16.msra.mxu0 %v818
    %926 = vmatprep.subr.bf16.mxu0 %v823
    %927 = vmatpush1.bf16.msra.mxu0 %v822
    %928 = vmatprep.subr.bf16.mxu0 %v827
    %929 = vmatpush1.bf16.msra.mxu0 %v826
    %930 = vmatprep.subr.bf16.mxu0 %v831
    %931 = vmatpush1.bf16.msra.mxu0 %v830
    %932 = vmatprep.subr.bf16.mxu0 %v835
    %933 = vmatpush1.bf16.msra.mxu0 %v834
    %934 = vmatprep.subr.bf16.mxu0 %v879
    %935 = vmatpush1.bf16.msra.mxu0 %v876
    %936 = vmatprep.subr.bf16.mxu0 0
    %937 = vmatpush1.bf16.msra.mxu0 0
    %938 = vmatprep.subr.bf16.mxu0 0
    %939 = vmatpush1.bf16.msra.mxu0 0
    %940 = vmatprep.subr.bf16.mxu0 0
    %941 = vmatpush1.bf16.msra.mxu0 0
    %942 = vmatprep.subr.bf16.mxu0 0
    %943 = vmatpush1.bf16.msra.mxu0 0
    %944 = vmatprep.subr.bf16.mxu0 0
    %945 = vmatpush1.bf16.msra.mxu0 0
    %946 = vmatprep.subr.bf16.mxu0 0
    %947 = vmatpush1.bf16.msra.mxu0 0
    %948 = vmatprep.subr.bf16.mxu0 0
    %949 = vmatpush1.bf16.msra.mxu0 0
    %950 = vmatprep.subr.bf16.mxu0 0
    %951 = vmatpush1.bf16.msra.mxu0 0
    %952 = vmatprep.subr.bf16.mxu0 0
    %953 = vmatpush1.bf16.msra.mxu0 0
    %954 = vmatprep.mubr.bf16.mxu0 0
    %955 = vmatmul.mubr.bf16.gmra.mrb[0].mxu0 %v866
    %v956 = vpop.f32.mrb[0].mxu0
    %v957 = vadd.f32 %v719, %v956
    %v958 = vpop.f32.mrb[0].mxu0
    %v959 = vadd.f32 %v723, %v958
    %v960 = vpop.f32.mrb[0].mxu0
    %v961 = vpop.f32.mrb[0].mxu0
    %962 = vdwg.mxu0
    %v963 = vmax.f32 %v916, 0.0
    %v964 = vmax.f32 %v918, 0.0
    %v965 = vmax.f32 %v957, 0.0
    %v966 = vmax.f32 %v959, 0.0
    %v967 = vld [vmem:[%s10] sm:$0xff]
    %v968 = vld [vmem:[%s10 + $0x8] sm:$0xff]
    %v969 = vld [vmem:[%s10 + $0x10] sm:$0xff]
    %v970 = vld [vmem:[%s10 + $0x18] sm:$0xff]
    %v971 = vld [vmem:[%s10 + $0x20] sm:$0xff]
    %v972 = vld [vmem:[%s10 + $0x28] sm:$0xff]
    %v973 = vld [vmem:[%s10 + $0x30] sm:$0xff]
    %v974 = vld [vmem:[%s10 + $0x38] sm:$0xff]
    %v975 = vld [vmem:[%s10 + $0x40] sm:$0xff]
    %v976 = vld [vmem:[%s10 + $0x48] sm:$0xff]
    %v977 = vld [vmem:[%s10 + $0x50] sm:$0xff]
    %v978 = vld [vmem:[%s10 + $0x58] sm:$0xff]
    %v979 = vld [vmem:[%s10 + $0x60] sm:$0xff]
    %v980 = vld [vmem:[%s10 + $0x68] sm:$0xff]
    %v981 = vld [vmem:[%s10 + $0x70] sm:$0xff]
    %v982 = vld [vmem:[%s10 + $0x78] sm:$0xff]
    %v983 = vld [vmem:[%s10 + $0x80] sm:$0xff]
    %v984 = vld [vmem:[%s10 + $0x88] sm:$0xff]
    %v985 = vld [vmem:[%s10 + $0x90] sm:$0xff]
    %v986 = vld [vmem:[%s10 + $0x98] sm:$0xff]
    %v987 = vld [vmem:[%s10 + $0xa0] sm:$0xff]
    %v988 = vld [vmem:[%s10 + $0xa8] sm:$0xff]
    %v989 = vld [vmem:[%s10 + $0xb0] sm:$0xff]
    %v990 = vld [vmem:[%s10 + $0xb8] sm:$0xff]
    %v991 = vld [vmem:[%s10 + $0xc0] sm:$0xff]
    %v992 = vld [vmem:[%s10 + $0xc8] sm:$0xff]
    %v993 = vld [vmem:[%s10 + $0xd0] sm:$0x33]
    %v994 = vld [vmem:[%s10 + $0xd8] sm:$0x33]
    %v995 = vld [vmem:[#allocation8] sm:$0xf]
    %v997 = vlaneseq
    %v998 = vshrl.u32 %v997, 7
    %v999 = vsub.s32 0, %v998
    %v1000 = vrot.slane %v995, %v999
    %v1001 = vlaneseq
    %v1002 = vshrl.u32 %v1001, 7
    %v1003 = vsub.s32 1, %v1002
    %v1004 = vrot.slane %v995, %v1003
    %v1005 = vlaneseq
    %v1006 = vshrl.u32 %v1005, 7
    %v1007 = vsub.s32 2, %v1006
    %v1008 = vrot.slane %v995, %v1007
    %v1009 = vlaneseq
    %v1010 = vshrl.u32 %v1009, 7
    %v1011 = vsub.s32 3, %v1010
    %v1012 = vrot.slane %v995, %v1011
    %v1045 = vunpack.c.l.b16 %v967
    %v1046 = vunpack.c.h.b16 %v967
    %v1047 = vunpack.c.l.b16 %v968
    %v1048 = vunpack.c.h.b16 %v968
    %v1049 = vunpack.c.l.b16 %v969
    %v1050 = vunpack.c.h.b16 %v969
    %v1051 = vunpack.c.l.b16 %v970
    %v1052 = vunpack.c.h.b16 %v970
    %v1053 = vunpack.c.l.b16 %v971
    %v1054 = vunpack.c.h.b16 %v971
    %v1055 = vunpack.c.l.b16 %v972
    %v1056 = vunpack.c.h.b16 %v972
    %v1057 = vunpack.c.l.b16 %v973
    %v1058 = vunpack.c.h.b16 %v973
    %v1059 = vunpack.c.l.b16 %v974
    %v1060 = vunpack.c.h.b16 %v974
    %v1061 = vunpack.c.l.b16 %v975
    %v1062 = vunpack.c.h.b16 %v975
    %v1063 = vunpack.c.l.b16 %v976
    %v1064 = vunpack.c.h.b16 %v976
    %v1065 = vunpack.c.l.b16 %v977
    %v1066 = vunpack.c.h.b16 %v977
    %v1067 = vunpack.c.l.b16 %v978
    %v1068 = vunpack.c.h.b16 %v978
    %v1069 = vunpack.c.l.b16 %v979
    %v1070 = vunpack.c.h.b16 %v979
    %v1071 = vunpack.c.l.b16 %v980
    %v1072 = vunpack.c.h.b16 %v980
    %v1073 = vunpack.c.l.b16 %v981
    %v1074 = vunpack.c.h.b16 %v981
    %v1075 = vunpack.c.l.b16 %v982
    %v1076 = vunpack.c.h.b16 %v982
    %v1077 = vunpack.c.l.b16 %v983
    %v1078 = vunpack.c.h.b16 %v983
    %v1079 = vunpack.c.l.b16 %v984
    %v1080 = vunpack.c.h.b16 %v984
    %v1081 = vunpack.c.l.b16 %v985
    %v1082 = vunpack.c.h.b16 %v985
    %v1083 = vunpack.c.l.b16 %v986
    %v1084 = vunpack.c.h.b16 %v986
    %v1085 = vunpack.c.l.b16 %v987
    %v1086 = vunpack.c.h.b16 %v987
    %v1087 = vunpack.c.l.b16 %v988
    %v1088 = vunpack.c.h.b16 %v988
    %v1089 = vunpack.c.l.b16 %v989
    %v1090 = vunpack.c.h.b16 %v989
    %v1091 = vunpack.c.l.b16 %v990
    %v1092 = vunpack.c.h.b16 %v990
    %v1093 = vunpack.c.l.b16 %v991
    %v1094 = vunpack.c.h.b16 %v991
    %v1095 = vunpack.c.l.b16 %v992
    %v1096 = vunpack.c.h.b16 %v992
    %v1097 = vunpack.c.l.b16 %v993
    %v1098 = vunpack.c.h.b16 %v993
    %v1099 = vunpack.c.l.b16 %v994
    %v1100 = vunpack.c.h.b16 %v994
    %v1101 = vpack.c.b16 %v1049, %v1045
    %v1102 = vpack.c.b16 %v1050, %v1046
    %v1103 = vpack.c.b16 %v1051, %v1047
    %v1104 = vpack.c.b16 %v1052, %v1048
    %v1105 = vpack.c.b16 %v1057, %v1053
    %v1106 = vpack.c.b16 %v1058, %v1054
    %v1107 = vpack.c.b16 %v1059, %v1055
    %v1108 = vpack.c.b16 %v1060, %v1056
    %v1109 = vpack.c.b16 %v1065, %v1061
    %v1110 = vpack.c.b16 %v1066, %v1062
    %v1111 = vpack.c.b16 %v1067, %v1063
    %v1112 = vpack.c.b16 %v1068, %v1064
    %v1113 = vpack.c.b16 %v1073, %v1069
    %v1114 = vpack.c.b16 %v1074, %v1070
    %v1115 = vpack.c.b16 %v1075, %v1071
    %v1116 = vpack.c.b16 %v1076, %v1072
    %v1117 = vpack.c.b16 %v1081, %v1077
    %v1118 = vpack.c.b16 %v1082, %v1078
    %v1119 = vpack.c.b16 %v1083, %v1079
    %v1120 = vpack.c.b16 %v1084, %v1080
    %v1121 = vpack.c.b16 %v1089, %v1085
    %v1122 = vpack.c.b16 %v1090, %v1086
    %v1123 = vpack.c.b16 %v1091, %v1087
    %v1124 = vpack.c.b16 %v1092, %v1088
    %v1125 = vpack.c.b16 %v1097, %v1093
    %v1126 = vpack.c.b16 %v1098, %v1094
    %v1127 = vpack.c.b16 %v1099, %v1095
    %v1128 = vpack.c.b16 %v1100, %v1096
    %v1154 = vsel %vm868, %v1125, 0
    %v1157 = vsel %vm868, %v1126, 0
    %v1160 = vsel %vm868, %v1127, 0
    %v1163 = vsel %vm868, %v1128, 0
    %1165 = vmatprep.subr.bf16.mxu0 %v1102
    %1166 = vmatpush1.bf16.msra.mxu0 %v1101
    %1167 = vmatprep.subr.bf16.mxu0 %v1106
    %1168 = vmatpush1.bf16.msra.mxu0 %v1105
    %1169 = vmatprep.subr.bf16.mxu0 %v1110
    %1170 = vmatpush1.bf16.msra.mxu0 %v1109
    %1171 = vmatprep.subr.bf16.mxu0 %v1114
    %1172 = vmatpush1.bf16.msra.mxu0 %v1113
    %1173 = vmatprep.subr.bf16.mxu0 %v1118
    %1174 = vmatpush1.bf16.msra.mxu0 %v1117
    %1175 = vmatprep.subr.bf16.mxu0 %v1122
    %1176 = vmatpush1.bf16.msra.mxu0 %v1121
    %1177 = vmatprep.subr.bf16.mxu0 %v1157
    %1178 = vmatpush1.bf16.msra.mxu0 %v1154
    %1179 = vmatprep.subr.bf16.mxu0 0
    %1180 = vmatpush1.bf16.msra.mxu0 0
    %1181 = vmatprep.subr.bf16.mxu0 0
    %1182 = vmatpush1.bf16.msra.mxu0 0
    %1183 = vmatprep.subr.bf16.mxu0 0
    %1184 = vmatpush1.bf16.msra.mxu0 0
    %1185 = vmatprep.subr.bf16.mxu0 0
    %1186 = vmatpush1.bf16.msra.mxu0 0
    %1187 = vmatprep.subr.bf16.mxu0 0
    %1188 = vmatpush1.bf16.msra.mxu0 0
    %1189 = vmatprep.subr.bf16.mxu0 0
    %1190 = vmatpush1.bf16.msra.mxu0 0
    %1191 = vmatprep.subr.bf16.mxu0 0
    %1192 = vmatpush1.bf16.msra.mxu0 0
    %1193 = vmatprep.subr.bf16.mxu0 0
    %1194 = vmatpush1.bf16.msra.mxu0 0
    %1195 = vmatprep.subr.bf16.mxu0 0
    %1196 = vmatpush1.bf16.msra.mxu0 0
    %1197 = vmatprep.mubr.bf16.mxu0 0
    %1198 = vmatmul.mubr.bf16.gmra.mrb[0].mxu0 %v866
    %v1199 = vpop.f32.mrb[0].mxu0
    %v1200 = vadd.f32 %v1000, %v1199
    %v1201 = vpop.f32.mrb[0].mxu0
    %v1202 = vadd.f32 %v1004, %v1201
    %v1203 = vpop.f32.mrb[0].mxu0
    %v1204 = vpop.f32.mrb[0].mxu0
    %1205 = vdwg.mxu0
    %1206 = vmatprep.subr.bf16.mxu0 %v1104
    %1207 = vmatpush1.bf16.msra.mxu0 %v1103
    %1208 = vmatprep.subr.bf16.mxu0 %v1108
    %1209 = vmatpush1.bf16.msra.mxu0 %v1107
    %1210 = vmatprep.subr.bf16.mxu0 %v1112
    %1211 = vmatpush1.bf16.msra.mxu0 %v1111
    %1212 = vmatprep.subr.bf16.mxu0 %v1116
    %1213 = vmatpush1.bf16.msra.mxu0 %v1115
    %1214 = vmatprep.subr.bf16.mxu0 %v1120
    %1215 = vmatpush1.bf16.msra.mxu0 %v1119
    %1216 = vmatprep.subr.bf16.mxu0 %v1124
    %1217 = vmatpush1.bf16.msra.mxu0 %v1123
    %1218 = vmatprep.subr.bf16.mxu0 %v1163
    %1219 = vmatpush1.bf16.msra.mxu0 %v1160
    %1220 = vmatprep.subr.bf16.mxu0 0
    %1221 = vmatpush1.bf16.msra.mxu0 0
    %1222 = vmatprep.subr.bf16.mxu0 0
    %1223 = vmatpush1.bf16.msra.mxu0 0
    %1224 = vmatprep.subr.bf16.mxu0 0
    %1225 = vmatpush1.bf16.msra.mxu0 0
    %1226 = vmatprep.subr.bf16.mxu0 0
    %1227 = vmatpush1.bf16.msra.mxu0 0
    %1228 = vmatprep.subr.bf16.mxu0 0
    %1229 = vmatpush1.bf16.msra.mxu0 0
    %1230 = vmatprep.subr.bf16.mxu0 0
    %1231 = vmatpush1.bf16.msra.mxu0 0
    %1232 = vmatprep.subr.bf16.mxu0 0
    %1233 = vmatpush1.bf16.msra.mxu0 0
    %1234 = vmatprep.subr.bf16.mxu0 0
    %1235 = vmatpush1.bf16.msra.mxu0 0
    %1236 = vmatprep.subr.bf16.mxu0 0
    %1237 = vmatpush1.bf16.msra.mxu0 0
    %1238 = vmatprep.mubr.bf16.mxu0 0
    %1239 = vmatmul.mubr.bf16.gmra.mrb[0].mxu0 %v866
    %v1240 = vpop.f32.mrb[0].mxu0
    %v1241 = vadd.f32 %v1008, %v1240
    %v1242 = vpop.f32.mrb[0].mxu0
    %v1243 = vadd.f32 %v1012, %v1242
    %v1244 = vpop.f32.mrb[0].mxu0
    %v1245 = vpop.f32.mrb[0].mxu0
    %1246 = vdwg.mxu0
    %v1247 = vmax.f32 %v1200, 0.0
    %v1248 = vmax.f32 %v1202, 0.0
    %v1249 = vmax.f32 %v1241, 0.0
    %v1250 = vmax.f32 %v1243, 0.0
    %v1251 = vld [vmem:[%s12] sm:$0xff]
    %v1252 = vld [vmem:[%s12 + $0x8] sm:$0xf]
    %v1253 = vld [vmem:[%s12 + $0xc] sm:$0xff]
    %v1254 = vld [vmem:[%s12 + $0x14] sm:$0xf]
    %v1255 = vld [vmem:[%s12 + $0x18] sm:$0xff]
    %v1256 = vld [vmem:[%s12 + $0x20] sm:$0xf]
    %v1257 = vld [vmem:[%s12 + $0x24] sm:$0xff]
    %v1258 = vld [vmem:[%s12 + $0x2c] sm:$0xf]
    %v1259 = vld [vmem:[%s12 + $0x30] sm:$0xff]
    %v1260 = vld [vmem:[%s12 + $0x38] sm:$0xf]
    %v1261 = vld [vmem:[%s12 + $0x3c] sm:$0xff]
    %v1262 = vld [vmem:[%s12 + $0x44] sm:$0xf]
    %v1263 = vld [vmem:[%s12 + $0x48] sm:$0xff]
    %v1264 = vld [vmem:[%s12 + $0x50] sm:$0xf]
    %v1265 = vld [vmem:[%s12 + $0x54] sm:$0xff]
    %v1266 = vld [vmem:[%s12 + $0x5c] sm:$0xf]
    %v1267 = vld [vmem:[%s12 + $0x60] sm:$0xff]
    %v1268 = vld [vmem:[%s12 + $0x68] sm:$0xf]
    %v1269 = vld [vmem:[%s12 + $0x6c] sm:$0xff]
    %v1270 = vld [vmem:[%s12 + $0x74] sm:$0xf]
    %v1271 = vld [vmem:[%s12 + $0x78] sm:$0xff]
    %v1272 = vld [vmem:[%s12 + $0x80] sm:$0xf]
    %v1273 = vld [vmem:[%s12 + $0x84] sm:$0xff]
    %v1274 = vld [vmem:[%s12 + $0x8c] sm:$0xf]
    %v1275 = vld [vmem:[%s12 + $0x90] sm:$0xff]
    %v1276 = vld [vmem:[%s12 + $0x98] sm:$0xf]
    %v1277 = vld [vmem:[%s12 + $0x9c] sm:$0xff]
    %v1278 = vld [vmem:[%s12 + $0xa4] sm:$0xf]
    %v1279 = vld [vmem:[%s12 + $0xa8] sm:$0xff]
    %v1280 = vld [vmem:[%s12 + $0xb0] sm:$0xf]
    %v1281 = vld [vmem:[%s12 + $0xb4] sm:$0xff]
    %v1282 = vld [vmem:[%s12 + $0xbc] sm:$0xf]
    %v1283 = vld [vmem:[%s12 + $0xc0] sm:$0xff]
    %v1284 = vld [vmem:[%s12 + $0xc8] sm:$0xf]
    %v1285 = vld [vmem:[%s12 + $0xcc] sm:$0xff]
    %v1286 = vld [vmem:[%s12 + $0xd4] sm:$0xf]
    %v1287 = vld [vmem:[%s12 + $0xd8] sm:$0xff]
    %v1288 = vld [vmem:[%s12 + $0xe0] sm:$0xf]
    %v1289 = vld [vmem:[%s12 + $0xe4] sm:$0xff]
    %v1290 = vld [vmem:[%s12 + $0xec] sm:$0xf]
    %v1291 = vld [vmem:[%s12 + $0xf0] sm:$0xff]
    %v1292 = vld [vmem:[%s12 + $0xf8] sm:$0xf]
    %v1293 = vld [vmem:[%s12 + $0xfc] sm:$0xff]
    %v1294 = vld [vmem:[%s12 + $0x104] sm:$0xf]
    %v1295 = vld [vmem:[%s12 + $0x108] sm:$0xff]
    %v1296 = vld [vmem:[%s12 + $0x110] sm:$0xf]
    %v1297 = vld [vmem:[%s12 + $0x114] sm:$0xff]
    %v1298 = vld [vmem:[%s12 + $0x11c] sm:$0xf]
    %v1299 = vld [vmem:[%s12 + $0x120] sm:$0xff]
    %v1300 = vld [vmem:[%s12 + $0x128] sm:$0xf]
    %v1301 = vld [vmem:[%s12 + $0x12c] sm:$0xff]
    %v1302 = vld [vmem:[%s12 + $0x134] sm:$0xf]
    %v1303 = vld [vmem:[%s12 + $0x138] sm:$0xff]
    %v1304 = vld [vmem:[%s12 + $0x140] sm:$0xf]
    %v1305 = vld [vmem:[%s12 + $0x144] sm:$0xff]
    %v1306 = vld [vmem:[%s12 + $0x14c] sm:$0xf]
    %v1307 = vld [vmem:[%s12 + $0x150] sm:$0xff]
    %v1308 = vld [vmem:[%s12 + $0x158] sm:$0xf]
    %v1309 = vld [vmem:[%s12 + $0x15c] sm:$0xff]
    %v1310 = vld [vmem:[%s12 + $0x164] sm:$0xf]
    %v1311 = vld [vmem:[%s12 + $0x168] sm:$0xff]
    %v1312 = vld [vmem:[%s12 + $0x170] sm:$0xf]
    %v1313 = vld [vmem:[%s12 + $0x174] sm:$0xff]
    %v1314 = vld [vmem:[%s12 + $0x17c] sm:$0xf]
    %v1315 = vld [vmem:[%s12 + $0x180] sm:$0xff]
    %v1316 = vld [vmem:[%s12 + $0x188] sm:$0xf]
    %v1317 = vld [vmem:[%s12 + $0x18c] sm:$0xff]
    %v1318 = vld [vmem:[%s12 + $0x194] sm:$0xf]
    %v1319 = vld [vmem:[%s12 + $0x198] sm:$0xff]
    %v1320 = vld [vmem:[%s12 + $0x1a0] sm:$0xf]
    %v1321 = vld [vmem:[%s12 + $0x1a4] sm:$0xff]
    %v1322 = vld [vmem:[%s12 + $0x1ac] sm:$0xf]
    %v1323 = vld [vmem:[%s12 + $0x1b0] sm:$0xff]
    %v1324 = vld [vmem:[%s12 + $0x1b8] sm:$0xf]
    %v1325 = vld [vmem:[%s12 + $0x1bc] sm:$0xff]
    %v1326 = vld [vmem:[%s12 + $0x1c4] sm:$0xf]
    %v1327 = vld [vmem:[%s12 + $0x1c8] sm:$0xff]
    %v1328 = vld [vmem:[%s12 + $0x1d0] sm:$0xf]
    %v1329 = vld [vmem:[%s12 + $0x1d4] sm:$0xff]
    %v1330 = vld [vmem:[%s12 + $0x1dc] sm:$0xf]
    %v1331 = vld [vmem:[%s12 + $0x1e0] sm:$0xff]
    %v1332 = vld [vmem:[%s12 + $0x1e8] sm:$0xf]
    %v1333 = vld [vmem:[%s12 + $0x1ec] sm:$0xff]
    %v1334 = vld [vmem:[%s12 + $0x1f4] sm:$0xf]
    %v1335 = vld [vmem:[%s12 + $0x1f8] sm:$0xff]
    %v1336 = vld [vmem:[%s12 + $0x200] sm:$0xf]
    %v1337 = vld [vmem:[%s12 + $0x204] sm:$0xff]
    %v1338 = vld [vmem:[%s12 + $0x20c] sm:$0xf]
    %v1339 = vld [vmem:[%s12 + $0x210] sm:$0xff]
    %v1340 = vld [vmem:[%s12 + $0x218] sm:$0xf]
    %v1341 = vld [vmem:[%s12 + $0x21c] sm:$0xff]
    %v1342 = vld [vmem:[%s12 + $0x224] sm:$0xf]
    %v1343 = vld [vmem:[%s12 + $0x228] sm:$0xff]
    %v1344 = vld [vmem:[%s12 + $0x230] sm:$0xf]
    %v1345 = vld [vmem:[%s12 + $0x234] sm:$0xff]
    %v1346 = vld [vmem:[%s12 + $0x23c] sm:$0xf]
    %v1347 = vld [vmem:[%s12 + $0x240] sm:$0xff]
    %v1348 = vld [vmem:[%s12 + $0x248] sm:$0xf]
    %v1349 = vld [vmem:[%s12 + $0x24c] sm:$0xff]
    %v1350 = vld [vmem:[%s12 + $0x254] sm:$0xf]
    %v1351 = vpack.c.bf16 %v963, %v963
    %v1352 = vpack.c.bf16 %v964, %v964
    %v1353 = vpack.c.bf16 %v965, %v965
    %v1354 = vpack.c.bf16 %v966, %v966
    %v1355 = vld [vmem:[#allocation10] sm:$0x7]
    %v1357 = vlaneseq
    %v1358 = vshrl.u32 %v1357, 7
    %v1359 = vsub.s32 0, %v1358
    %v1360 = vrot.slane %v1355, %v1359
    %v1361 = vlaneseq
    %v1362 = vshrl.u32 %v1361, 7
    %v1363 = vsub.s32 1, %v1362
    %v1364 = vrot.slane %v1355, %v1363
    %v1365 = vlaneseq
    %v1366 = vshrl.u32 %v1365, 7
    %v1367 = vsub.s32 2, %v1366
    %v1368 = vrot.slane %v1355, %v1367
    %v1472 = vunpack.c.l.b16 %v1251
    %v1473 = vunpack.c.h.b16 %v1251
    %v1474 = vunpack.c.l.b16 %v1252
    %v1475 = vunpack.c.l.b16 %v1253
    %v1476 = vunpack.c.h.b16 %v1253
    %v1477 = vunpack.c.l.b16 %v1254
    %v1478 = vunpack.c.l.b16 %v1255
    %v1479 = vunpack.c.h.b16 %v1255
    %v1480 = vunpack.c.l.b16 %v1256
    %v1481 = vunpack.c.l.b16 %v1257
    %v1482 = vunpack.c.h.b16 %v1257
    %v1483 = vunpack.c.l.b16 %v1258
    %v1484 = vunpack.c.l.b16 %v1259
    %v1485 = vunpack.c.h.b16 %v1259
    %v1486 = vunpack.c.l.b16 %v1260
    %v1487 = vunpack.c.l.b16 %v1261
    %v1488 = vunpack.c.h.b16 %v1261
    %v1489 = vunpack.c.l.b16 %v1262
    %v1490 = vunpack.c.l.b16 %v1263
    %v1491 = vunpack.c.h.b16 %v1263
    %v1492 = vunpack.c.l.b16 %v1264
    %v1493 = vunpack.c.l.b16 %v1265
    %v1494 = vunpack.c.h.b16 %v1265
    %v1495 = vunpack.c.l.b16 %v1266
    %v1496 = vunpack.c.l.b16 %v1267
    %v1497 = vunpack.c.h.b16 %v1267
    %v1498 = vunpack.c.l.b16 %v1268
    %v1499 = vunpack.c.l.b16 %v1269
    %v1500 = vunpack.c.h.b16 %v1269
    %v1501 = vunpack.c.l.b16 %v1270
    %v1502 = vunpack.c.l.b16 %v1271
    %v1503 = vunpack.c.h.b16 %v1271
    %v1504 = vunpack.c.l.b16 %v1272
    %v1505 = vunpack.c.l.b16 %v1273
    %v1506 = vunpack.c.h.b16 %v1273
    %v1507 = vunpack.c.l.b16 %v1274
    %v1508 = vunpack.c.l.b16 %v1275
    %v1509 = vunpack.c.h.b16 %v1275
    %v1510 = vunpack.c.l.b16 %v1276
    %v1511 = vunpack.c.l.b16 %v1277
    %v1512 = vunpack.c.h.b16 %v1277
    %v1513 = vunpack.c.l.b16 %v1278
    %v1514 = vunpack.c.l.b16 %v1279
    %v1515 = vunpack.c.h.b16 %v1279
    %v1516 = vunpack.c.l.b16 %v1280
    %v1517 = vunpack.c.l.b16 %v1281
    %v1518 = vunpack.c.h.b16 %v1281
    %v1519 = vunpack.c.l.b16 %v1282
    %v1520 = vunpack.c.l.b16 %v1283
    %v1521 = vunpack.c.h.b16 %v1283
    %v1522 = vunpack.c.l.b16 %v1284
    %v1523 = vunpack.c.l.b16 %v1285
    %v1524 = vunpack.c.h.b16 %v1285
    %v1525 = vunpack.c.l.b16 %v1286
    %v1526 = vunpack.c.l.b16 %v1287
    %v1527 = vunpack.c.h.b16 %v1287
    %v1528 = vunpack.c.l.b16 %v1288
    %v1529 = vunpack.c.l.b16 %v1289
    %v1530 = vunpack.c.h.b16 %v1289
    %v1531 = vunpack.c.l.b16 %v1290
    %v1532 = vunpack.c.l.b16 %v1291
    %v1533 = vunpack.c.h.b16 %v1291
    %v1534 = vunpack.c.l.b16 %v1292
    %v1535 = vunpack.c.l.b16 %v1293
    %v1536 = vunpack.c.h.b16 %v1293
    %v1537 = vunpack.c.l.b16 %v1294
    %v1538 = vunpack.c.l.b16 %v1295
    %v1539 = vunpack.c.h.b16 %v1295
    %v1540 = vunpack.c.l.b16 %v1296
    %v1541 = vunpack.c.l.b16 %v1297
    %v1542 = vunpack.c.h.b16 %v1297
    %v1543 = vunpack.c.l.b16 %v1298
    %v1544 = vunpack.c.l.b16 %v1299
    %v1545 = vunpack.c.h.b16 %v1299
    %v1546 = vunpack.c.l.b16 %v1300
    %v1547 = vunpack.c.l.b16 %v1301
    %v1548 = vunpack.c.h.b16 %v1301
    %v1549 = vunpack.c.l.b16 %v1302
    %v1550 = vunpack.c.l.b16 %v1303
    %v1551 = vunpack.c.h.b16 %v1303
    %v1552 = vunpack.c.l.b16 %v1304
    %v1553 = vunpack.c.l.b16 %v1305
    %v1554 = vunpack.c.h.b16 %v1305
    %v1555 = vunpack.c.l.b16 %v1306
    %v1556 = vunpack.c.l.b16 %v1307
    %v1557 = vunpack.c.h.b16 %v1307
    %v1558 = vunpack.c.l.b16 %v1308
    %v1559 = vunpack.c.l.b16 %v1309
    %v1560 = vunpack.c.h.b16 %v1309
    %v1561 = vunpack.c.l.b16 %v1310
    %v1562 = vunpack.c.l.b16 %v1311
    %v1563 = vunpack.c.h.b16 %v1311
    %v1564 = vunpack.c.l.b16 %v1312
    %v1565 = vunpack.c.l.b16 %v1313
    %v1566 = vunpack.c.h.b16 %v1313
    %v1567 = vunpack.c.l.b16 %v1314
    %v1568 = vunpack.c.l.b16 %v1315
    %v1569 = vunpack.c.h.b16 %v1315
    %v1570 = vunpack.c.l.b16 %v1316
    %v1571 = vunpack.c.l.b16 %v1317
    %v1572 = vunpack.c.h.b16 %v1317
    %v1573 = vunpack.c.l.b16 %v1318
    %v1574 = vunpack.c.l.b16 %v1319
    %v1575 = vunpack.c.h.b16 %v1319
    %v1576 = vunpack.c.l.b16 %v1320
    %v1577 = vunpack.c.l.b16 %v1321
    %v1578 = vunpack.c.h.b16 %v1321
    %v1579 = vunpack.c.l.b16 %v1322
    %v1580 = vunpack.c.l.b16 %v1323
    %v1581 = vunpack.c.h.b16 %v1323
    %v1582 = vunpack.c.l.b16 %v1324
    %v1583 = vunpack.c.l.b16 %v1325
    %v1584 = vunpack.c.h.b16 %v1325
    %v1585 = vunpack.c.l.b16 %v1326
    %v1586 = vunpack.c.l.b16 %v1327
    %v1587 = vunpack.c.h.b16 %v1327
    %v1588 = vunpack.c.l.b16 %v1328
    %v1589 = vunpack.c.l.b16 %v1329
    %v1590 = vunpack.c.h.b16 %v1329
    %v1591 = vunpack.c.l.b16 %v1330
    %v1592 = vunpack.c.l.b16 %v1331
    %v1593 = vunpack.c.h.b16 %v1331
    %v1594 = vunpack.c.l.b16 %v1332
    %v1595 = vunpack.c.l.b16 %v1333
    %v1596 = vunpack.c.h.b16 %v1333
    %v1597 = vunpack.c.l.b16 %v1334
    %v1598 = vunpack.c.l.b16 %v1335
    %v1599 = vunpack.c.h.b16 %v1335
    %v1600 = vunpack.c.l.b16 %v1336
    %v1601 = vunpack.c.l.b16 %v1337
    %v1602 = vunpack.c.h.b16 %v1337
    %v1603 = vunpack.c.l.b16 %v1338
    %v1604 = vunpack.c.l.b16 %v1339
    %v1605 = vunpack.c.h.b16 %v1339
    %v1606 = vunpack.c.l.b16 %v1340
    %v1607 = vunpack.c.l.b16 %v1341
    %v1608 = vunpack.c.h.b16 %v1341
    %v1609 = vunpack.c.l.b16 %v1342
    %v1610 = vunpack.c.l.b16 %v1343
    %v1611 = vunpack.c.h.b16 %v1343
    %v1612 = vunpack.c.l.b16 %v1344
    %v1613 = vunpack.c.l.b16 %v1345
    %v1614 = vunpack.c.h.b16 %v1345
    %v1615 = vunpack.c.l.b16 %v1346
    %v1616 = vunpack.c.l.b16 %v1347
    %v1617 = vunpack.c.h.b16 %v1347
    %v1618 = vunpack.c.l.b16 %v1348
    %v1619 = vunpack.c.l.b16 %v1349
    %v1620 = vunpack.c.h.b16 %v1349
    %v1621 = vunpack.c.l.b16 %v1350
    %v1622 = vpack.c.b16 %v1475, %v1472
    %v1623 = vpack.c.b16 %v1476, %v1473
    %v1624 = vpack.c.b16 %v1477, %v1474
    %v1625 = vpack.c.b16 %v1481, %v1478
    %v1626 = vpack.c.b16 %v1482, %v1479
    %v1627 = vpack.c.b16 %v1483, %v1480
    %v1628 = vpack.c.b16 %v1487, %v1484
    %v1629 = vpack.c.b16 %v1488, %v1485
    %v1630 = vpack.c.b16 %v1489, %v1486
    %v1631 = vpack.c.b16 %v1493, %v1490
    %v1632 = vpack.c.b16 %v1494, %v1491
    %v1633 = vpack.c.b16 %v1495, %v1492
    %v1634 = vpack.c.b16 %v1499, %v1496
    %v1635 = vpack.c.b16 %v1500, %v1497
    %v1636 = vpack.c.b16 %v1501, %v1498
    %v1637 = vpack.c.b16 %v1505, %v1502
    %v1638 = vpack.c.b16 %v1506, %v1503
    %v1639 = vpack.c.b16 %v1507, %v1504
    %v1640 = vpack.c.b16 %v1511, %v1508
    %v1641 = vpack.c.b16 %v1512, %v1509
    %v1642 = vpack.c.b16 %v1513, %v1510
    %v1643 = vpack.c.b16 %v1517, %v1514
    %v1644 = vpack.c.b16 %v1518, %v1515
    %v1645 = vpack.c.b16 %v1519, %v1516
    %v1646 = vpack.c.b16 %v1523, %v1520
    %v1647 = vpack.c.b16 %v1524, %v1521
    %v1648 = vpack.c.b16 %v1525, %v1522
    %v1649 = vpack.c.b16 %v1529, %v1526
    %v1650 = vpack.c.b16 %v1530, %v1527
    %v1651 = vpack.c.b16 %v1531, %v1528
    %v1652 = vpack.c.b16 %v1535, %v1532
    %v1653 = vpack.c.b16 %v1536, %v1533
    %v1654 = vpack.c.b16 %v1537, %v1534
    %v1655 = vpack.c.b16 %v1541, %v1538
    %v1656 = vpack.c.b16 %v1542, %v1539
    %v1657 = vpack.c.b16 %v1543, %v1540
    %v1658 = vpack.c.b16 %v1547, %v1544
    %v1659 = vpack.c.b16 %v1548, %v1545
    %v1660 = vpack.c.b16 %v1549, %v1546
    %v1661 = vpack.c.b16 %v1553, %v1550
    %v1662 = vpack.c.b16 %v1554, %v1551
    %v1663 = vpack.c.b16 %v1555, %v1552
    %v1664 = vpack.c.b16 %v1559, %v1556
    %v1665 = vpack.c.b16 %v1560, %v1557
    %v1666 = vpack.c.b16 %v1561, %v1558
    %v1667 = vpack.c.b16 %v1565, %v1562
    %v1668 = vpack.c.b16 %v1566, %v1563
    %v1669 = vpack.c.b16 %v1567, %v1564
    %v1670 = vpack.c.b16 %v1571, %v1568
    %v1671 = vpack.c.b16 %v1572, %v1569
    %v1672 = vpack.c.b16 %v1573, %v1570
    %v1673 = vpack.c.b16 %v1577, %v1574
    %v1674 = vpack.c.b16 %v1578, %v1575
    %v1675 = vpack.c.b16 %v1579, %v1576
    %v1676 = vpack.c.b16 %v1583, %v1580
    %v1677 = vpack.c.b16 %v1584, %v1581
    %v1678 = vpack.c.b16 %v1585, %v1582
    %v1679 = vpack.c.b16 %v1589, %v1586
    %v1680 = vpack.c.b16 %v1590, %v1587
    %v1681 = vpack.c.b16 %v1591, %v1588
    %v1682 = vpack.c.b16 %v1595, %v1592
    %v1683 = vpack.c.b16 %v1596, %v1593
    %v1684 = vpack.c.b16 %v1597, %v1594
    %v1685 = vpack.c.b16 %v1601, %v1598
    %v1686 = vpack.c.b16 %v1602, %v1599
    %v1687 = vpack.c.b16 %v1603, %v1600
    %v1688 = vpack.c.b16 %v1607, %v1604
    %v1689 = vpack.c.b16 %v1608, %v1605
    %v1690 = vpack.c.b16 %v1609, %v1606
    %v1691 = vpack.c.b16 %v1613, %v1610
    %v1692 = vpack.c.b16 %v1614, %v1611
    %v1693 = vpack.c.b16 %v1615, %v1612
    %v1694 = vpack.c.b16 %v1619, %v1616
    %v1695 = vpack.c.b16 %v1620, %v1617
    %v1696 = vpack.c.b16 %v1621, %v1618
    %v1773 = vsel %vm356, %v1354, 0
    %1775 = vmatprep.subr.bf16.mxu0 %v1623
    %1776 = vmatpush1.bf16.msra.mxu0 %v1622
    %1777 = vmatprep.subr.bf16.mxu0 %v1626
    %1778 = vmatpush1.bf16.msra.mxu0 %v1625
    %1779 = vmatprep.subr.bf16.mxu0 %v1629
    %1780 = vmatpush1.bf16.msra.mxu0 %v1628
    %1781 = vmatprep.subr.bf16.mxu0 %v1632
    %1782 = vmatpush1.bf16.msra.mxu0 %v1631
    %1783 = vmatprep.subr.bf16.mxu0 %v1635
    %1784 = vmatpush1.bf16.msra.mxu0 %v1634
    %1785 = vmatprep.subr.bf16.mxu0 %v1638
    %1786 = vmatpush1.bf16.msra.mxu0 %v1637
    %1787 = vmatprep.subr.bf16.mxu0 %v1641
    %1788 = vmatpush1.bf16.msra.mxu0 %v1640
    %1789 = vmatprep.subr.bf16.mxu0 %v1644
    %1790 = vmatpush1.bf16.msra.mxu0 %v1643
    %1791 = vmatprep.subr.bf16.mxu0 %v1647
    %1792 = vmatpush1.bf16.msra.mxu0 %v1646
    %1793 = vmatprep.subr.bf16.mxu0 %v1650
    %1794 = vmatpush1.bf16.msra.mxu0 %v1649
    %1795 = vmatprep.subr.bf16.mxu0 %v1653
    %1796 = vmatpush1.bf16.msra.mxu0 %v1652
    %1797 = vmatprep.subr.bf16.mxu0 %v1656
    %1798 = vmatpush1.bf16.msra.mxu0 %v1655
    %1799 = vmatprep.subr.bf16.mxu0 %v1659
    %1800 = vmatpush1.bf16.msra.mxu0 %v1658
    %1801 = vmatprep.subr.bf16.mxu0 %v1662
    %1802 = vmatpush1.bf16.msra.mxu0 %v1661
    %1803 = vmatprep.subr.bf16.mxu0 %v1665
    %1804 = vmatpush1.bf16.msra.mxu0 %v1664
    %1805 = vmatprep.subr.bf16.mxu0 %v1668
    %1806 = vmatpush1.bf16.msra.mxu0 %v1667
    %1807 = vmatprep.mubr.bf16.mxu0 %v1352
    %1808 = vmatmul.mubr.bf16.gmra.mrb[0].mxu0 %v1351
    %v1809 = vpop.f32.mrb[0].mxu0
    %v1810 = vadd.f32 %v1360, %v1809
    %v1811 = vpop.f32.mrb[0].mxu0
    %v1812 = vadd.f32 %v1364, %v1811
    %v1813 = vpop.f32.mrb[0].mxu0
    %v1814 = vpop.f32.mrb[0].mxu0
    %1815 = vdwg.mxu0
    %1816 = vmatprep.subr.bf16.mxu0 %v1671
    %1817 = vmatpush1.bf16.msra.mxu0 %v1670
    %1818 = vmatprep.subr.bf16.mxu0 %v1674
    %1819 = vmatpush1.bf16.msra.mxu0 %v1673
    %1820 = vmatprep.subr.bf16.mxu0 %v1677
    %1821 = vmatpush1.bf16.msra.mxu0 %v1676
    %1822 = vmatprep.subr.bf16.mxu0 %v1680
    %1823 = vmatpush1.bf16.msra.mxu0 %v1679
    %1824 = vmatprep.subr.bf16.mxu0 %v1683
    %1825 = vmatpush1.bf16.msra.mxu0 %v1682
    %1826 = vmatprep.subr.bf16.mxu0 %v1686
    %1827 = vmatpush1.bf16.msra.mxu0 %v1685
    %1828 = vmatprep.subr.bf16.mxu0 %v1689
    %1829 = vmatpush1.bf16.msra.mxu0 %v1688
    %1830 = vmatprep.subr.bf16.mxu0 %v1692
    %1831 = vmatpush1.bf16.msra.mxu0 %v1691
    %1832 = vmatprep.subr.bf16.mxu0 %v1695
    %1833 = vmatpush1.bf16.msra.mxu0 %v1694
    %1834 = vmatprep.subr.bf16.mxu0 0
    %1835 = vmatpush1.bf16.msra.mxu0 0
    %1836 = vmatprep.subr.bf16.mxu0 0
    %1837 = vmatpush1.bf16.msra.mxu0 0
    %1838 = vmatprep.subr.bf16.mxu0 0
    %1839 = vmatpush1.bf16.msra.mxu0 0
    %1840 = vmatprep.subr.bf16.mxu0 0
    %1841 = vmatpush1.bf16.msra.mxu0 0
    %1842 = vmatprep.subr.bf16.mxu0 0
    %1843 = vmatpush1.bf16.msra.mxu0 0
    %1844 = vmatprep.subr.bf16.mxu0 0
    %1845 = vmatpush1.bf16.msra.mxu0 0
    %1846 = vmatprep.subr.bf16.mxu0 0
    %1847 = vmatpush1.bf16.msra.mxu0 0
    %1848 = vmatprep.mubr.bf16.mxu0 %v1773
    %1849 = vmatmul.mubr.bf16.gmra.mrb[0].mxu0 %v1353
    %v1850 = vpop.f32.mrb[0].mxu0
    %v1851 = vadd.f32 %v1810, %v1850
    %v1852 = vpop.f32.mrb[0].mxu0
    %v1853 = vadd.f32 %v1812, %v1852
    %v1854 = vpop.f32.mrb[0].mxu0
    %v1855 = vpop.f32.mrb[0].mxu0
    %1856 = vdwg.mxu0
    %1857 = vmatprep.subr.bf16.mxu0 0
    %1858 = vmatpush1.bf16.msra.mxu0 %v1624
    %1859 = vmatprep.subr.bf16.mxu0 0
    %1860 = vmatpush1.bf16.msra.mxu0 %v1627
    %1861 = vmatprep.subr.bf16.mxu0 0
    %1862 = vmatpush1.bf16.msra.mxu0 %v1630
    %1863 = vmatprep.subr.bf16.mxu0 0
    %1864 = vmatpush1.bf16.msra.mxu0 %v1633
    %1865 = vmatprep.subr.bf16.mxu0 0
    %1866 = vmatpush1.bf16.msra.mxu0 %v1636
    %1867 = vmatprep.subr.bf16.mxu0 0
    %1868 = vmatpush1.bf16.msra.mxu0 %v1639
    %1869 = vmatprep.subr.bf16.mxu0 0
    %1870 = vmatpush1.bf16.msra.mxu0 %v1642
    %1871 = vmatprep.subr.bf16.mxu0 0
    %1872 = vmatpush1.bf16.msra.mxu0 %v1645
    %1873 = vmatprep.subr.bf16.mxu0 0
    %1874 = vmatpush1.bf16.msra.mxu0 %v1648
    %1875 = vmatprep.subr.bf16.mxu0 0
    %1876 = vmatpush1.bf16.msra.mxu0 %v1651
    %1877 = vmatprep.subr.bf16.mxu0 0
    %1878 = vmatpush1.bf16.msra.mxu0 %v1654
    %1879 = vmatprep.subr.bf16.mxu0 0
    %1880 = vmatpush1.bf16.msra.mxu0 %v1657
    %1881 = vmatprep.subr.bf16.mxu0 0
    %1882 = vmatpush1.bf16.msra.mxu0 %v1660
    %1883 = vmatprep.subr.bf16.mxu0 0
    %1884 = vmatpush1.bf16.msra.mxu0 %v1663
    %1885 = vmatprep.subr.bf16.mxu0 0
    %1886 = vmatpush1.bf16.msra.mxu0 %v1666
    %1887 = vmatprep.subr.bf16.mxu0 0
    %1888 = vmatpush1.bf16.msra.mxu0 %v1669
    %1889 = vmatprep.mubr.bf16.mxu0 %v1352
    %1890 = vmatmul.mubr.bf16.gmra.mrb[0].mxu0 %v1351
    %v1891 = vpop.f32.mrb[0].mxu0
    %v1892 = vadd.f32 %v1368, %v1891
    %v1893 = vpop.f32.mrb[0].mxu0
    %v1894 = vpop.f32.mrb[0].mxu0
    %v1895 = vpop.f32.mrb[0].mxu0
    %1896 = vdwg.mxu0
    %1897 = vmatprep.subr.bf16.mxu0 0
    %1898 = vmatpush1.bf16.msra.mxu0 %v1672
    %1899 = vmatprep.subr.bf16.mxu0 0
    %1900 = vmatpush1.bf16.msra.mxu0 %v1675
    %1901 = vmatprep.subr.bf16.mxu0 0
    %1902 = vmatpush1.bf16.msra.mxu0 %v1678
    %1903 = vmatprep.subr.bf16.mxu0 0
    %1904 = vmatpush1.bf16.msra.mxu0 %v1681
    %1905 = vmatprep.subr.bf16.mxu0 0
    %1906 = vmatpush1.bf16.msra.mxu0 %v1684
    %1907 = vmatprep.subr.bf16.mxu0 0
    %1908 = vmatpush1.bf16.msra.mxu0 %v1687
    %1909 = vmatprep.subr.bf16.mxu0 0
    %1910 = vmatpush1.bf16.msra.mxu0 %v1690
    %1911 = vmatprep.subr.bf16.mxu0 0
    %1912 = vmatpush1.bf16.msra.mxu0 %v1693
    %1913 = vmatprep.subr.bf16.mxu0 0
    %1914 = vmatpush1.bf16.msra.mxu0 %v1696
    %1915 = vmatprep.subr.bf16.mxu0 0
    %1916 = vmatpush1.bf16.msra.mxu0 0
    %1917 = vmatprep.subr.bf16.mxu0 0
    %1918 = vmatpush1.bf16.msra.mxu0 0
    %1919 = vmatprep.subr.bf16.mxu0 0
    %1920 = vmatpush1.bf16.msra.mxu0 0
    %1921 = vmatprep.subr.bf16.mxu0 0
    %1922 = vmatpush1.bf16.msra.mxu0 0
    %1923 = vmatprep.subr.bf16.mxu0 0
    %1924 = vmatpush1.bf16.msra.mxu0 0
    %1925 = vmatprep.subr.bf16.mxu0 0
    %1926 = vmatpush1.bf16.msra.mxu0 0
    %1927 = vmatprep.subr.bf16.mxu0 0
    %1928 = vmatpush1.bf16.msra.mxu0 0
    %1929 = vmatprep.mubr.bf16.mxu0 %v1773
    %1930 = vmatmul.mubr.bf16.gmra.mrb[0].mxu0 %v1353
    %v1931 = vpop.f32.mrb[0].mxu0
    %v1932 = vadd.f32 %v1892, %v1931
    %v1933 = vpop.f32.mrb[0].mxu0
    %v1934 = vpop.f32.mrb[0].mxu0
    %v1935 = vpop.f32.mrb[0].mxu0
    %1936 = vdwg.mxu0
    %v1937 = vmax.f32 %v1851, 0.0
    %v1938 = vmax.f32 %v1853, 0.0
    %v1939 = vmax.f32 %v1932, 0.0
    %v1940 = vld [vmem:[#allocation11] sm:$0xff]
    %v1941 = vld [vmem:[#allocation11 + $0x8] sm:$0xf]
    %v1942 = vld [vmem:[#allocation11 + $0xc] sm:$0xff]
    %v1943 = vld [vmem:[#allocation11 + $0x14] sm:$0xf]
    %v1944 = vld [vmem:[#allocation11 + $0x18] sm:$0xff]
    %v1945 = vld [vmem:[#allocation11 + $0x20] sm:$0xf]
    %v1946 = vld [vmem:[#allocation11 + $0x24] sm:$0xff]
    %v1947 = vld [vmem:[#allocation11 + $0x2c] sm:$0xf]
    %v1948 = vld [vmem:[#allocation11 + $0x30] sm:$0xff]
    %v1949 = vld [vmem:[#allocation11 + $0x38] sm:$0xf]
    %v1950 = vld [vmem:[#allocation11 + $0x3c] sm:$0xff]
    %v1951 = vld [vmem:[#allocation11 + $0x44] sm:$0xf]
    %v1952 = vld [vmem:[#allocation11 + $0x48] sm:$0xff]
    %v1953 = vld [vmem:[#allocation11 + $0x50] sm:$0xf]
    %v1954 = vld [vmem:[#allocation11 + $0x54] sm:$0xff]
    %v1955 = vld [vmem:[#allocation11 + $0x5c] sm:$0xf]
    %v1956 = vld [vmem:[#allocation11 + $0x60] sm:$0xff]
    %v1957 = vld [vmem:[#allocation11 + $0x68] sm:$0xf]
    %v1958 = vld [vmem:[#allocation11 + $0x6c] sm:$0xff]
    %v1959 = vld [vmem:[#allocation11 + $0x74] sm:$0xf]
    %v1960 = vld [vmem:[#allocation11 + $0x78] sm:$0xff]
    %v1961 = vld [vmem:[#allocation11 + $0x80] sm:$0xf]
    %v1962 = vld [vmem:[#allocation11 + $0x84] sm:$0xff]
    %v1963 = vld [vmem:[#allocation11 + $0x8c] sm:$0xf]
    %v1964 = vld [vmem:[#allocation11 + $0x90] sm:$0xff]
    %v1965 = vld [vmem:[#allocation11 + $0x98] sm:$0xf]
    %v1966 = vld [vmem:[#allocation11 + $0x9c] sm:$0xff]
    %v1967 = vld [vmem:[#allocation11 + $0xa4] sm:$0xf]
    %v1968 = vld [vmem:[#allocation11 + $0xa8] sm:$0xff]
    %v1969 = vld [vmem:[#allocation11 + $0xb0] sm:$0xf]
    %v1970 = vld [vmem:[#allocation11 + $0xb4] sm:$0xff]
    %v1971 = vld [vmem:[#allocation11 + $0xbc] sm:$0xf]
    %v1972 = vld [vmem:[#allocation11 + $0xc0] sm:$0xff]
    %v1973 = vld [vmem:[#allocation11 + $0xc8] sm:$0xf]
    %v1974 = vld [vmem:[#allocation11 + $0xcc] sm:$0xff]
    %v1975 = vld [vmem:[#allocation11 + $0xd4] sm:$0xf]
    %v1976 = vld [vmem:[#allocation11 + $0xd8] sm:$0xff]
    %v1977 = vld [vmem:[#allocation11 + $0xe0] sm:$0xf]
    %v1978 = vld [vmem:[#allocation11 + $0xe4] sm:$0xff]
    %v1979 = vld [vmem:[#allocation11 + $0xec] sm:$0xf]
    %v1980 = vld [vmem:[#allocation11 + $0xf0] sm:$0xff]
    %v1981 = vld [vmem:[#allocation11 + $0xf8] sm:$0xf]
    %v1982 = vld [vmem:[#allocation11 + $0xfc] sm:$0xff]
    %v1983 = vld [vmem:[#allocation11 + $0x104] sm:$0xf]
    %v1984 = vld [vmem:[#allocation11 + $0x108] sm:$0xff]
    %v1985 = vld [vmem:[#allocation11 + $0x110] sm:$0xf]
    %v1986 = vld [vmem:[#allocation11 + $0x114] sm:$0xff]
    %v1987 = vld [vmem:[#allocation11 + $0x11c] sm:$0xf]
    %v1988 = vld [vmem:[#allocation11 + $0x120] sm:$0xff]
    %v1989 = vld [vmem:[#allocation11 + $0x128] sm:$0xf]
    %v1990 = vld [vmem:[#allocation11 + $0x12c] sm:$0xff]
    %v1991 = vld [vmem:[#allocation11 + $0x134] sm:$0xf]
    %v1992 = vld [vmem:[#allocation11 + $0x138] sm:$0xff]
    %v1993 = vld [vmem:[#allocation11 + $0x140] sm:$0xf]
    %v1994 = vld [vmem:[#allocation11 + $0x144] sm:$0xff]
    %v1995 = vld [vmem:[#allocation11 + $0x14c] sm:$0xf]
    %v1996 = vld [vmem:[#allocation11 + $0x150] sm:$0xff]
    %v1997 = vld [vmem:[#allocation11 + $0x158] sm:$0xf]
    %v1998 = vld [vmem:[#allocation11 + $0x15c] sm:$0xff]
    %v1999 = vld [vmem:[#allocation11 + $0x164] sm:$0xf]
    %v2000 = vld [vmem:[#allocation11 + $0x168] sm:$0xff]
    %v2001 = vld [vmem:[#allocation11 + $0x170] sm:$0xf]
    %v2002 = vld [vmem:[#allocation11 + $0x174] sm:$0xff]
    %v2003 = vld [vmem:[#allocation11 + $0x17c] sm:$0xf]
    %v2004 = vld [vmem:[#allocation11 + $0x180] sm:$0xff]
    %v2005 = vld [vmem:[#allocation11 + $0x188] sm:$0xf]
    %v2006 = vld [vmem:[#allocation11 + $0x18c] sm:$0xff]
    %v2007 = vld [vmem:[#allocation11 + $0x194] sm:$0xf]
    %v2008 = vld [vmem:[#allocation11 + $0x198] sm:$0xff]
    %v2009 = vld [vmem:[#allocation11 + $0x1a0] sm:$0xf]
    %v2010 = vld [vmem:[#allocation11 + $0x1a4] sm:$0xff]
    %v2011 = vld [vmem:[#allocation11 + $0x1ac] sm:$0xf]
    %v2012 = vld [vmem:[#allocation11 + $0x1b0] sm:$0xff]
    %v2013 = vld [vmem:[#allocation11 + $0x1b8] sm:$0xf]
    %v2014 = vld [vmem:[#allocation11 + $0x1bc] sm:$0xff]
    %v2015 = vld [vmem:[#allocation11 + $0x1c4] sm:$0xf]
    %v2016 = vld [vmem:[#allocation11 + $0x1c8] sm:$0xff]
    %v2017 = vld [vmem:[#allocation11 + $0x1d0] sm:$0xf]
    %v2018 = vld [vmem:[#allocation11 + $0x1d4] sm:$0xff]
    %v2019 = vld [vmem:[#allocation11 + $0x1dc] sm:$0xf]
    %v2020 = vld [vmem:[#allocation11 + $0x1e0] sm:$0xff]
    %v2021 = vld [vmem:[#allocation11 + $0x1e8] sm:$0xf]
    %v2022 = vld [vmem:[#allocation11 + $0x1ec] sm:$0xff]
    %v2023 = vld [vmem:[#allocation11 + $0x1f4] sm:$0xf]
    %v2024 = vld [vmem:[#allocation11 + $0x1f8] sm:$0xff]
    %v2025 = vld [vmem:[#allocation11 + $0x200] sm:$0xf]
    %v2026 = vld [vmem:[#allocation11 + $0x204] sm:$0xff]
    %v2027 = vld [vmem:[#allocation11 + $0x20c] sm:$0xf]
    %v2028 = vld [vmem:[#allocation11 + $0x210] sm:$0xff]
    %v2029 = vld [vmem:[#allocation11 + $0x218] sm:$0xf]
    %v2030 = vld [vmem:[#allocation11 + $0x21c] sm:$0xff]
    %v2031 = vld [vmem:[#allocation11 + $0x224] sm:$0xf]
    %v2032 = vld [vmem:[#allocation11 + $0x228] sm:$0xff]
    %v2033 = vld [vmem:[#allocation11 + $0x230] sm:$0xf]
    %v2034 = vld [vmem:[#allocation11 + $0x234] sm:$0xff]
    %v2035 = vld [vmem:[#allocation11 + $0x23c] sm:$0xf]
    %v2036 = vld [vmem:[#allocation11 + $0x240] sm:$0xff]
    %v2037 = vld [vmem:[#allocation11 + $0x248] sm:$0xf]
    %v2038 = vld [vmem:[#allocation11 + $0x24c] sm:$0xff]
    %v2039 = vld [vmem:[#allocation11 + $0x254] sm:$0xf]
    %v2040 = vpack.c.bf16 %v1247, %v1247
    %v2041 = vpack.c.bf16 %v1248, %v1248
    %v2042 = vpack.c.bf16 %v1249, %v1249
    %v2043 = vpack.c.bf16 %v1250, %v1250
    %v2044 = vld [vmem:[#allocation13] sm:$0x7]
    %v2046 = vlaneseq
    %v2047 = vshrl.u32 %v2046, 7
    %v2048 = vsub.s32 0, %v2047
    %v2049 = vrot.slane %v2044, %v2048
    %v2050 = vlaneseq
    %v2051 = vshrl.u32 %v2050, 7
    %v2052 = vsub.s32 1, %v2051
    %v2053 = vrot.slane %v2044, %v2052
    %v2054 = vlaneseq
    %v2055 = vshrl.u32 %v2054, 7
    %v2056 = vsub.s32 2, %v2055
    %v2057 = vrot.slane %v2044, %v2056
    %v2161 = vunpack.c.l.b16 %v1940
    %v2162 = vunpack.c.h.b16 %v1940
    %v2163 = vunpack.c.l.b16 %v1941
    %v2164 = vunpack.c.l.b16 %v1942
    %v2165 = vunpack.c.h.b16 %v1942
    %v2166 = vunpack.c.l.b16 %v1943
    %v2167 = vunpack.c.l.b16 %v1944
    %v2168 = vunpack.c.h.b16 %v1944
    %v2169 = vunpack.c.l.b16 %v1945
    %v2170 = vunpack.c.l.b16 %v1946
    %v2171 = vunpack.c.h.b16 %v1946
    %v2172 = vunpack.c.l.b16 %v1947
    %v2173 = vunpack.c.l.b16 %v1948
    %v2174 = vunpack.c.h.b16 %v1948
    %v2175 = vunpack.c.l.b16 %v1949
    %v2176 = vunpack.c.l.b16 %v1950
    %v2177 = vunpack.c.h.b16 %v1950
    %v2178 = vunpack.c.l.b16 %v1951
    %v2179 = vunpack.c.l.b16 %v1952
    %v2180 = vunpack.c.h.b16 %v1952
    %v2181 = vunpack.c.l.b16 %v1953
    %v2182 = vunpack.c.l.b16 %v1954
    %v2183 = vunpack.c.h.b16 %v1954
    %v2184 = vunpack.c.l.b16 %v1955
    %v2185 = vunpack.c.l.b16 %v1956
    %v2186 = vunpack.c.h.b16 %v1956
    %v2187 = vunpack.c.l.b16 %v1957
    %v2188 = vunpack.c.l.b16 %v1958
    %v2189 = vunpack.c.h.b16 %v1958
    %v2190 = vunpack.c.l.b16 %v1959
    %v2191 = vunpack.c.l.b16 %v1960
    %v2192 = vunpack.c.h.b16 %v1960
    %v2193 = vunpack.c.l.b16 %v1961
    %v2194 = vunpack.c.l.b16 %v1962
    %v2195 = vunpack.c.h.b16 %v1962
    %v2196 = vunpack.c.l.b16 %v1963
    %v2197 = vunpack.c.l.b16 %v1964
    %v2198 = vunpack.c.h.b16 %v1964
    %v2199 = vunpack.c.l.b16 %v1965
    %v2200 = vunpack.c.l.b16 %v1966
    %v2201 = vunpack.c.h.b16 %v1966
    %v2202 = vunpack.c.l.b16 %v1967
    %v2203 = vunpack.c.l.b16 %v1968
    %v2204 = vunpack.c.h.b16 %v1968
    %v2205 = vunpack.c.l.b16 %v1969
    %v2206 = vunpack.c.l.b16 %v1970
    %v2207 = vunpack.c.h.b16 %v1970
    %v2208 = vunpack.c.l.b16 %v1971
    %v2209 = vunpack.c.l.b16 %v1972
    %v2210 = vunpack.c.h.b16 %v1972
    %v2211 = vunpack.c.l.b16 %v1973
    %v2212 = vunpack.c.l.b16 %v1974
    %v2213 = vunpack.c.h.b16 %v1974
    %v2214 = vunpack.c.l.b16 %v1975
    %v2215 = vunpack.c.l.b16 %v1976
    %v2216 = vunpack.c.h.b16 %v1976
    %v2217 = vunpack.c.l.b16 %v1977
    %v2218 = vunpack.c.l.b16 %v1978
    %v2219 = vunpack.c.h.b16 %v1978
    %v2220 = vunpack.c.l.b16 %v1979
    %v2221 = vunpack.c.l.b16 %v1980
    %v2222 = vunpack.c.h.b16 %v1980
    %v2223 = vunpack.c.l.b16 %v1981
    %v2224 = vunpack.c.l.b16 %v1982
    %v2225 = vunpack.c.h.b16 %v1982
    %v2226 = vunpack.c.l.b16 %v1983
    %v2227 = vunpack.c.l.b16 %v1984
    %v2228 = vunpack.c.h.b16 %v1984
    %v2229 = vunpack.c.l.b16 %v1985
    %v2230 = vunpack.c.l.b16 %v1986
    %v2231 = vunpack.c.h.b16 %v1986
    %v2232 = vunpack.c.l.b16 %v1987
    %v2233 = vunpack.c.l.b16 %v1988
    %v2234 = vunpack.c.h.b16 %v1988
    %v2235 = vunpack.c.l.b16 %v1989
    %v2236 = vunpack.c.l.b16 %v1990
    %v2237 = vunpack.c.h.b16 %v1990
    %v2238 = vunpack.c.l.b16 %v1991
    %v2239 = vunpack.c.l.b16 %v1992
    %v2240 = vunpack.c.h.b16 %v1992
    %v2241 = vunpack.c.l.b16 %v1993
    %v2242 = vunpack.c.l.b16 %v1994
    %v2243 = vunpack.c.h.b16 %v1994
    %v2244 = vunpack.c.l.b16 %v1995
    %v2245 = vunpack.c.l.b16 %v1996
    %v2246 = vunpack.c.h.b16 %v1996
    %v2247 = vunpack.c.l.b16 %v1997
    %v2248 = vunpack.c.l.b16 %v1998
    %v2249 = vunpack.c.h.b16 %v1998
    %v2250 = vunpack.c.l.b16 %v1999
    %v2251 = vunpack.c.l.b16 %v2000
    %v2252 = vunpack.c.h.b16 %v2000
    %v2253 = vunpack.c.l.b16 %v2001
    %v2254 = vunpack.c.l.b16 %v2002
    %v2255 = vunpack.c.h.b16 %v2002
    %v2256 = vunpack.c.l.b16 %v2003
    %v2257 = vunpack.c.l.b16 %v2004
    %v2258 = vunpack.c.h.b16 %v2004
    %v2259 = vunpack.c.l.b16 %v2005
    %v2260 = vunpack.c.l.b16 %v2006
    %v2261 = vunpack.c.h.b16 %v2006
    %v2262 = vunpack.c.l.b16 %v2007
    %v2263 = vunpack.c.l.b16 %v2008
    %v2264 = vunpack.c.h.b16 %v2008
    %v2265 = vunpack.c.l.b16 %v2009
    %v2266 = vunpack.c.l.b16 %v2010
    %v2267 = vunpack.c.h.b16 %v2010
    %v2268 = vunpack.c.l.b16 %v2011
    %v2269 = vunpack.c.l.b16 %v2012
    %v2270 = vunpack.c.h.b16 %v2012
    %v2271 = vunpack.c.l.b16 %v2013
    %v2272 = vunpack.c.l.b16 %v2014
    %v2273 = vunpack.c.h.b16 %v2014
    %v2274 = vunpack.c.l.b16 %v2015
    %v2275 = vunpack.c.l.b16 %v2016
    %v2276 = vunpack.c.h.b16 %v2016
    %v2277 = vunpack.c.l.b16 %v2017
    %v2278 = vunpack.c.l.b16 %v2018
    %v2279 = vunpack.c.h.b16 %v2018
    %v2280 = vunpack.c.l.b16 %v2019
    %v2281 = vunpack.c.l.b16 %v2020
    %v2282 = vunpack.c.h.b16 %v2020
    %v2283 = vunpack.c.l.b16 %v2021
    %v2284 = vunpack.c.l.b16 %v2022
    %v2285 = vunpack.c.h.b16 %v2022
    %v2286 = vunpack.c.l.b16 %v2023
    %v2287 = vunpack.c.l.b16 %v2024
    %v2288 = vunpack.c.h.b16 %v2024
    %v2289 = vunpack.c.l.b16 %v2025
    %v2290 = vunpack.c.l.b16 %v2026
    %v2291 = vunpack.c.h.b16 %v2026
    %v2292 = vunpack.c.l.b16 %v2027
    %v2293 = vunpack.c.l.b16 %v2028
    %v2294 = vunpack.c.h.b16 %v2028
    %v2295 = vunpack.c.l.b16 %v2029
    %v2296 = vunpack.c.l.b16 %v2030
    %v2297 = vunpack.c.h.b16 %v2030
    %v2298 = vunpack.c.l.b16 %v2031
    %v2299 = vunpack.c.l.b16 %v2032
    %v2300 = vunpack.c.h.b16 %v2032
    %v2301 = vunpack.c.l.b16 %v2033
    %v2302 = vunpack.c.l.b16 %v2034
    %v2303 = vunpack.c.h.b16 %v2034
    %v2304 = vunpack.c.l.b16 %v2035
    %v2305 = vunpack.c.l.b16 %v2036
    %v2306 = vunpack.c.h.b16 %v2036
    %v2307 = vunpack.c.l.b16 %v2037
    %v2308 = vunpack.c.l.b16 %v2038
    %v2309 = vunpack.c.h.b16 %v2038
    %v2310 = vunpack.c.l.b16 %v2039
    %v2311 = vpack.c.b16 %v2164, %v2161
    %v2312 = vpack.c.b16 %v2165, %v2162
    %v2313 = vpack.c.b16 %v2166, %v2163
    %v2314 = vpack.c.b16 %v2170, %v2167
    %v2315 = vpack.c.b16 %v2171, %v2168
    %v2316 = vpack.c.b16 %v2172, %v2169
    %v2317 = vpack.c.b16 %v2176, %v2173
    %v2318 = vpack.c.b16 %v2177, %v2174
    %v2319 = vpack.c.b16 %v2178, %v2175
    %v2320 = vpack.c.b16 %v2182, %v2179
    %v2321 = vpack.c.b16 %v2183, %v2180
    %v2322 = vpack.c.b16 %v2184, %v2181
    %v2323 = vpack.c.b16 %v2188, %v2185
    %v2324 = vpack.c.b16 %v2189, %v2186
    %v2325 = vpack.c.b16 %v2190, %v2187
    %v2326 = vpack.c.b16 %v2194, %v2191
    %v2327 = vpack.c.b16 %v2195, %v2192
    %v2328 = vpack.c.b16 %v2196, %v2193
    %v2329 = vpack.c.b16 %v2200, %v2197
    %v2330 = vpack.c.b16 %v2201, %v2198
    %v2331 = vpack.c.b16 %v2202, %v2199
    %v2332 = vpack.c.b16 %v2206, %v2203
    %v2333 = vpack.c.b16 %v2207, %v2204
    %v2334 = vpack.c.b16 %v2208, %v2205
    %v2335 = vpack.c.b16 %v2212, %v2209
    %v2336 = vpack.c.b16 %v2213, %v2210
    %v2337 = vpack.c.b16 %v2214, %v2211
    %v2338 = vpack.c.b16 %v2218, %v2215
    %v2339 = vpack.c.b16 %v2219, %v2216
    %v2340 = vpack.c.b16 %v2220, %v2217
    %v2341 = vpack.c.b16 %v2224, %v2221
    %v2342 = vpack.c.b16 %v2225, %v2222
    %v2343 = vpack.c.b16 %v2226, %v2223
    %v2344 = vpack.c.b16 %v2230, %v2227
    %v2345 = vpack.c.b16 %v2231, %v2228
    %v2346 = vpack.c.b16 %v2232, %v2229
    %v2347 = vpack.c.b16 %v2236, %v2233
    %v2348 = vpack.c.b16 %v2237, %v2234
    %v2349 = vpack.c.b16 %v2238, %v2235
    %v2350 = vpack.c.b16 %v2242, %v2239
    %v2351 = vpack.c.b16 %v2243, %v2240
    %v2352 = vpack.c.b16 %v2244, %v2241
    %v2353 = vpack.c.b16 %v2248, %v2245
    %v2354 = vpack.c.b16 %v2249, %v2246
    %v2355 = vpack.c.b16 %v2250, %v2247
    %v2356 = vpack.c.b16 %v2254, %v2251
    %v2357 = vpack.c.b16 %v2255, %v2252
    %v2358 = vpack.c.b16 %v2256, %v2253
    %v2359 = vpack.c.b16 %v2260, %v2257
    %v2360 = vpack.c.b16 %v2261, %v2258
    %v2361 = vpack.c.b16 %v2262, %v2259
    %v2362 = vpack.c.b16 %v2266, %v2263
    %v2363 = vpack.c.b16 %v2267, %v2264
    %v2364 = vpack.c.b16 %v2268, %v2265
    %v2365 = vpack.c.b16 %v2272, %v2269
    %v2366 = vpack.c.b16 %v2273, %v2270
    %v2367 = vpack.c.b16 %v2274, %v2271
    %v2368 = vpack.c.b16 %v2278, %v2275
    %v2369 = vpack.c.b16 %v2279, %v2276
    %v2370 = vpack.c.b16 %v2280, %v2277
    %v2371 = vpack.c.b16 %v2284, %v2281
    %v2372 = vpack.c.b16 %v2285, %v2282
    %v2373 = vpack.c.b16 %v2286, %v2283
    %v2374 = vpack.c.b16 %v2290, %v2287
    %v2375 = vpack.c.b16 %v2291, %v2288
    %v2376 = vpack.c.b16 %v2292, %v2289
    %v2377 = vpack.c.b16 %v2296, %v2293
    %v2378 = vpack.c.b16 %v2297, %v2294
    %v2379 = vpack.c.b16 %v2298, %v2295
    %v2380 = vpack.c.b16 %v2302, %v2299
    %v2381 = vpack.c.b16 %v2303, %v2300
    %v2382 = vpack.c.b16 %v2304, %v2301
    %v2383 = vpack.c.b16 %v2308, %v2305
    %v2384 = vpack.c.b16 %v2309, %v2306
    %v2385 = vpack.c.b16 %v2310, %v2307
    %v2462 = vsel %vm356, %v2043, 0
    %2464 = vmatprep.subr.bf16.mxu0 %v2312
    %2465 = vmatpush1.bf16.msra.mxu0 %v2311
    %2466 = vmatprep.subr.bf16.mxu0 %v2315
    %2467 = vmatpush1.bf16.msra.mxu0 %v2314
    %2468 = vmatprep.subr.bf16.mxu0 %v2318
    %2469 = vmatpush1.bf16.msra.mxu0 %v2317
    %2470 = vmatprep.subr.bf16.mxu0 %v2321
    %2471 = vmatpush1.bf16.msra.mxu0 %v2320
    %2472 = vmatprep.subr.bf16.mxu0 %v2324
    %2473 = vmatpush1.bf16.msra.mxu0 %v2323
    %2474 = vmatprep.subr.bf16.mxu0 %v2327
    %2475 = vmatpush1.bf16.msra.mxu0 %v2326
    %2476 = vmatprep.subr.bf16.mxu0 %v2330
    %2477 = vmatpush1.bf16.msra.mxu0 %v2329
    %2478 = vmatprep.subr.bf16.mxu0 %v2333
    %2479 = vmatpush1.bf16.msra.mxu0 %v2332
    %2480 = vmatprep.subr.bf16.mxu0 %v2336
    %2481 = vmatpush1.bf16.msra.mxu0 %v2335
    %2482 = vmatprep.subr.bf16.mxu0 %v2339
    %2483 = vmatpush1.bf16.msra.mxu0 %v2338
    %2484 = vmatprep.subr.bf16.mxu0 %v2342
    %2485 = vmatpush1.bf16.msra.mxu0 %v2341
    %2486 = vmatprep.subr.bf16.mxu0 %v2345
    %2487 = vmatpush1.bf16.msra.mxu0 %v2344
    %2488 = vmatprep.subr.bf16.mxu0 %v2348
    %2489 = vmatpush1.bf16.msra.mxu0 %v2347
    %2490 = vmatprep.subr.bf16.mxu0 %v2351
    %2491 = vmatpush1.bf16.msra.mxu0 %v2350
    %2492 = vmatprep.subr.bf16.mxu0 %v2354
    %2493 = vmatpush1.bf16.msra.mxu0 %v2353
    %2494 = vmatprep.subr.bf16.mxu0 %v2357
    %2495 = vmatpush1.bf16.msra.mxu0 %v2356
    %2496 = vmatprep.mubr.bf16.mxu0 %v2041
    %2497 = vmatmul.mubr.bf16.gmra.mrb[0].mxu0 %v2040
    %v2498 = vpop.f32.mrb[0].mxu0
    %v2499 = vadd.f32 %v2049, %v2498
    %v2500 = vpop.f32.mrb[0].mxu0
    %v2501 = vadd.f32 %v2053, %v2500
    %v2502 = vpop.f32.mrb[0].mxu0
    %v2503 = vpop.f32.mrb[0].mxu0
    %2504 = vdwg.mxu0
    %2505 = vmatprep.subr.bf16.mxu0 %v2360
    %2506 = vmatpush1.bf16.msra.mxu0 %v2359
    %2507 = vmatprep.subr.bf16.mxu0 %v2363
    %2508 = vmatpush1.bf16.msra.mxu0 %v2362
    %2509 = vmatprep.subr.bf16.mxu0 %v2366
    %2510 = vmatpush1.bf16.msra.mxu0 %v2365
    %2511 = vmatprep.subr.bf16.mxu0 %v2369
    %2512 = vmatpush1.bf16.msra.mxu0 %v2368
    %2513 = vmatprep.subr.bf16.mxu0 %v2372
    %2514 = vmatpush1.bf16.msra.mxu0 %v2371
    %2515 = vmatprep.subr.bf16.mxu0 %v2375
    %2516 = vmatpush1.bf16.msra.mxu0 %v2374
    %2517 = vmatprep.subr.bf16.mxu0 %v2378
    %2518 = vmatpush1.bf16.msra.mxu0 %v2377
    %2519 = vmatprep.subr.bf16.mxu0 %v2381
    %2520 = vmatpush1.bf16.msra.mxu0 %v2380
    %2521 = vmatprep.subr.bf16.mxu0 %v2384
    %2522 = vmatpush1.bf16.msra.mxu0 %v2383
    %2523 = vmatprep.subr.bf16.mxu0 0
    %2524 = vmatpush1.bf16.msra.mxu0 0
    %2525 = vmatprep.subr.bf16.mxu0 0
    %2526 = vmatpush1.bf16.msra.mxu0 0
    %2527 = vmatprep.subr.bf16.mxu0 0
    %2528 = vmatpush1.bf16.msra.mxu0 0
    %2529 = vmatprep.subr.bf16.mxu0 0
    %2530 = vmatpush1.bf16.msra.mxu0 0
    %2531 = vmatprep.subr.bf16.mxu0 0
    %2532 = vmatpush1.bf16.msra.mxu0 0
    %2533 = vmatprep.subr.bf16.mxu0 0
    %2534 = vmatpush1.bf16.msra.mxu0 0
    %2535 = vmatprep.subr.bf16.mxu0 0
    %2536 = vmatpush1.bf16.msra.mxu0 0
    %2537 = vmatprep.mubr.bf16.mxu0 %v2462
    %2538 = vmatmul.mubr.bf16.gmra.mrb[0].mxu0 %v2042
    %v2539 = vpop.f32.mrb[0].mxu0
    %v2540 = vadd.f32 %v2499, %v2539
    %v2541 = vpop.f32.mrb[0].mxu0
    %v2542 = vadd.f32 %v2501, %v2541
    %v2543 = vpop.f32.mrb[0].mxu0
    %v2544 = vpop.f32.mrb[0].mxu0
    %2545 = vdwg.mxu0
    %2546 = vmatprep.subr.bf16.mxu0 0
    %2547 = vmatpush1.bf16.msra.mxu0 %v2313
    %2548 = vmatprep.subr.bf16.mxu0 0
    %2549 = vmatpush1.bf16.msra.mxu0 %v2316
    %2550 = vmatprep.subr.bf16.mxu0 0
    %2551 = vmatpush1.bf16.msra.mxu0 %v2319
    %2552 = vmatprep.subr.bf16.mxu0 0
    %2553 = vmatpush1.bf16.msra.mxu0 %v2322
    %2554 = vmatprep.subr.bf16.mxu0 0
    %2555 = vmatpush1.bf16.msra.mxu0 %v2325
    %2556 = vmatprep.subr.bf16.mxu0 0
    %2557 = vmatpush1.bf16.msra.mxu0 %v2328
    %2558 = vmatprep.subr.bf16.mxu0 0
    %2559 = vmatpush1.bf16.msra.mxu0 %v2331
    %2560 = vmatprep.subr.bf16.mxu0 0
    %2561 = vmatpush1.bf16.msra.mxu0 %v2334
    %2562 = vmatprep.subr.bf16.mxu0 0
    %2563 = vmatpush1.bf16.msra.mxu0 %v2337
    %2564 = vmatprep.subr.bf16.mxu0 0
    %2565 = vmatpush1.bf16.msra.mxu0 %v2340
    %2566 = vmatprep.subr.bf16.mxu0 0
    %2567 = vmatpush1.bf16.msra.mxu0 %v2343
    %2568 = vmatprep.subr.bf16.mxu0 0
    %2569 = vmatpush1.bf16.msra.mxu0 %v2346
    %2570 = vmatprep.subr.bf16.mxu0 0
    %2571 = vmatpush1.bf16.msra.mxu0 %v2349
    %2572 = vmatprep.subr.bf16.mxu0 0
    %2573 = vmatpush1.bf16.msra.mxu0 %v2352
    %2574 = vmatprep.subr.bf16.mxu0 0
    %2575 = vmatpush1.bf16.msra.mxu0 %v2355
    %2576 = vmatprep.subr.bf16.mxu0 0
    %2577 = vmatpush1.bf16.msra.mxu0 %v2358
    %2578 = vmatprep.mubr.bf16.mxu0 %v2041
    %2579 = vmatmul.mubr.bf16.gmra.mrb[0].mxu0 %v2040
    %v2580 = vpop.f32.mrb[0].mxu0
    %v2581 = vadd.f32 %v2057, %v2580
    %v2582 = vpop.f32.mrb[0].mxu0
    %v2583 = vpop.f32.mrb[0].mxu0
    %v2584 = vpop.f32.mrb[0].mxu0
    %2585 = vdwg.mxu0
    %2586 = vmatprep.subr.bf16.mxu0 0
    %2587 = vmatpush1.bf16.msra.mxu0 %v2361
    %2588 = vmatprep.subr.bf16.mxu0 0
    %2589 = vmatpush1.bf16.msra.mxu0 %v2364
    %2590 = vmatprep.subr.bf16.mxu0 0
    %2591 = vmatpush1.bf16.msra.mxu0 %v2367
    %2592 = vmatprep.subr.bf16.mxu0 0
    %2593 = vmatpush1.bf16.msra.mxu0 %v2370
    %2594 = vmatprep.subr.bf16.mxu0 0
    %2595 = vmatpush1.bf16.msra.mxu0 %v2373
    %2596 = vmatprep.subr.bf16.mxu0 0
    %2597 = vmatpush1.bf16.msra.mxu0 %v2376
    %2598 = vmatprep.subr.bf16.mxu0 0
    %2599 = vmatpush1.bf16.msra.mxu0 %v2379
    %2600 = vmatprep.subr.bf16.mxu0 0
    %2601 = vmatpush1.bf16.msra.mxu0 %v2382
    %2602 = vmatprep.subr.bf16.mxu0 0
    %2603 = vmatpush1.bf16.msra.mxu0 %v2385
    %2604 = vmatprep.subr.bf16.mxu0 0
    %2605 = vmatpush1.bf16.msra.mxu0 0
    %2606 = vmatprep.subr.bf16.mxu0 0
    %2607 = vmatpush1.bf16.msra.mxu0 0
    %2608 = vmatprep.subr.bf16.mxu0 0
    %2609 = vmatpush1.bf16.msra.mxu0 0
    %2610 = vmatprep.subr.bf16.mxu0 0
    %2611 = vmatpush1.bf16.msra.mxu0 0
    %2612 = vmatprep.subr.bf16.mxu0 0
    %2613 = vmatpush1.bf16.msra.mxu0 0
    %2614 = vmatprep.subr.bf16.mxu0 0
    %2615 = vmatpush1.bf16.msra.mxu0 0
    %2616 = vmatprep.subr.bf16.mxu0 0
    %2617 = vmatpush1.bf16.msra.mxu0 0
    %2618 = vmatprep.mubr.bf16.mxu0 %v2462
    %2619 = vmatmul.mubr.bf16.gmra.mrb[0].mxu0 %v2042
    %v2620 = vpop.f32.mrb[0].mxu0
    %v2621 = vadd.f32 %v2581, %v2620
    %v2622 = vpop.f32.mrb[0].mxu0
    %v2623 = vpop.f32.mrb[0].mxu0
    %v2624 = vpop.f32.mrb[0].mxu0
    %2625 = vdwg.mxu0
    %v2626 = vmax.f32 %v2540, 0.0
    %v2627 = vmax.f32 %v2542, 0.0
    %v2628 = vmax.f32 %v2621, 0.0
    %v2629 = vld [vmem:[#allocation14] sm:$0xf]
    %v2630 = vld [vmem:[#allocation14 + $0x4] sm:$0xf]
    %v2631 = vld [vmem:[#allocation14 + $0x8] sm:$0xf]
    %v2632 = vld [vmem:[#allocation14 + $0xc] sm:$0xf]
    %v2633 = vld [vmem:[#allocation14 + $0x10] sm:$0xf]
    %v2634 = vld [vmem:[#allocation14 + $0x14] sm:$0xf]
    %v2635 = vld [vmem:[#allocation14 + $0x18] sm:$0xf]
    %v2636 = vld [vmem:[#allocation14 + $0x1c] sm:$0xf]
    %v2637 = vld [vmem:[#allocation14 + $0x20] sm:$0xf]
    %v2638 = vld [vmem:[#allocation14 + $0x24] sm:$0xf]
    %v2639 = vld [vmem:[#allocation14 + $0x28] sm:$0xf]
    %v2640 = vld [vmem:[#allocation14 + $0x2c] sm:$0xf]
    %v2641 = vld [vmem:[#allocation14 + $0x30] sm:$0xf]
    %v2642 = vld [vmem:[#allocation14 + $0x34] sm:$0xf]
    %v2643 = vld [vmem:[#allocation14 + $0x38] sm:$0xf]
    %v2644 = vld [vmem:[#allocation14 + $0x3c] sm:$0xf]
    %v2645 = vld [vmem:[#allocation14 + $0x40] sm:$0xf]
    %v2646 = vld [vmem:[#allocation14 + $0x44] sm:$0xf]
    %v2647 = vld [vmem:[#allocation14 + $0x48] sm:$0xf]
    %v2648 = vld [vmem:[#allocation14 + $0x4c] sm:$0xf]
    %v2649 = vld [vmem:[#allocation14 + $0x50] sm:$0xf]
    %v2650 = vld [vmem:[#allocation14 + $0x54] sm:$0xf]
    %v2651 = vld [vmem:[#allocation14 + $0x58] sm:$0xf]
    %v2652 = vld [vmem:[#allocation14 + $0x5c] sm:$0xf]
    %v2653 = vld [vmem:[#allocation14 + $0x60] sm:$0xf]
    %v2654 = vld [vmem:[#allocation14 + $0x64] sm:$0xf]
    %v2655 = vld [vmem:[#allocation14 + $0x68] sm:$0xf]
    %v2656 = vld [vmem:[#allocation14 + $0x6c] sm:$0xf]
    %v2657 = vld [vmem:[#allocation14 + $0x70] sm:$0xf]
    %v2658 = vld [vmem:[#allocation14 + $0x74] sm:$0xf]
    %v2659 = vld [vmem:[#allocation14 + $0x78] sm:$0xf]
    %v2660 = vld [vmem:[#allocation14 + $0x7c] sm:$0xf]
    %v2661 = vld [vmem:[#allocation14 + $0x80] sm:$0xf]
    %v2662 = vld [vmem:[#allocation14 + $0x84] sm:$0xf]
    %v2663 = vld [vmem:[#allocation14 + $0x88] sm:$0xf]
    %v2664 = vld [vmem:[#allocation14 + $0x8c] sm:$0xf]
    %v2665 = vld [vmem:[#allocation14 + $0x90] sm:$0xf]
    %v2666 = vld [vmem:[#allocation14 + $0x94] sm:$0x3]
    %v2667 = vpack.c.bf16 %v1937, %v1937
    %v2668 = vpack.c.bf16 %v1938, %v1938
    %v2669 = vpack.c.bf16 %v1939, %v1939
    %v2670 = vld [vmem:[#allocation16] sm:$0x1]
    %v2672 = vlaneseq
    %v2673 = vshrl.u32 %v2672, 7
    %v2674 = vsub.s32 0, %v2673
    %v2675 = vrot.slane %v2670, %v2674
    %v2715 = vunpack.c.l.b16 %v2629
    %v2716 = vunpack.c.l.b16 %v2630
    %v2717 = vunpack.c.l.b16 %v2631
    %v2718 = vunpack.c.l.b16 %v2632
    %v2719 = vunpack.c.l.b16 %v2633
    %v2720 = vunpack.c.l.b16 %v2634
    %v2721 = vunpack.c.l.b16 %v2635
    %v2722 = vunpack.c.l.b16 %v2636
    %v2723 = vunpack.c.l.b16 %v2637
    %v2724 = vunpack.c.l.b16 %v2638
    %v2725 = vunpack.c.l.b16 %v2639
    %v2726 = vunpack.c.l.b16 %v2640
    %v2727 = vunpack.c.l.b16 %v2641
    %v2728 = vunpack.c.l.b16 %v2642
    %v2729 = vunpack.c.l.b16 %v2643
    %v2730 = vunpack.c.l.b16 %v2644
    %v2731 = vunpack.c.l.b16 %v2645
    %v2732 = vunpack.c.l.b16 %v2646
    %v2733 = vunpack.c.l.b16 %v2647
    %v2734 = vunpack.c.l.b16 %v2648
    %v2735 = vunpack.c.l.b16 %v2649
    %v2736 = vunpack.c.l.b16 %v2650
    %v2737 = vunpack.c.l.b16 %v2651
    %v2738 = vunpack.c.l.b16 %v2652
    %v2739 = vunpack.c.l.b16 %v2653
    %v2740 = vunpack.c.l.b16 %v2654
    %v2741 = vunpack.c.l.b16 %v2655
    %v2742 = vunpack.c.l.b16 %v2656
    %v2743 = vunpack.c.l.b16 %v2657
    %v2744 = vunpack.c.l.b16 %v2658
    %v2745 = vunpack.c.l.b16 %v2659
    %v2746 = vunpack.c.l.b16 %v2660
    %v2747 = vunpack.c.l.b16 %v2661
    %v2748 = vunpack.c.l.b16 %v2662
    %v2749 = vunpack.c.l.b16 %v2663
    %v2750 = vunpack.c.l.b16 %v2664
    %v2751 = vunpack.c.l.b16 %v2665
    %v2752 = vunpack.c.l.b16 %v2666
    %v2753 = vpack.c.b16 %v2716, %v2715
    %v2754 = vpack.c.b16 %v2718, %v2717
    %v2755 = vpack.c.b16 %v2720, %v2719
    %v2756 = vpack.c.b16 %v2722, %v2721
    %v2757 = vpack.c.b16 %v2724, %v2723
    %v2758 = vpack.c.b16 %v2726, %v2725
    %v2759 = vpack.c.b16 %v2728, %v2727
    %v2760 = vpack.c.b16 %v2730, %v2729
    %v2761 = vpack.c.b16 %v2732, %v2731
    %v2762 = vpack.c.b16 %v2734, %v2733
    %v2763 = vpack.c.b16 %v2736, %v2735
    %v2764 = vpack.c.b16 %v2738, %v2737
    %v2765 = vpack.c.b16 %v2740, %v2739
    %v2766 = vpack.c.b16 %v2742, %v2741
    %v2767 = vpack.c.b16 %v2744, %v2743
    %v2768 = vpack.c.b16 %v2746, %v2745
    %v2769 = vpack.c.b16 %v2748, %v2747
    %v2770 = vpack.c.b16 %v2750, %v2749
    %v2771 = vpack.c.b16 %v2752, %v2751
    %vm2790 = vcmask 359424
    %v2792 = vsel %vm2790, %v2669, 0
    %v2795 = vsel %vm868, %v2771, 0
    %2797 = vmatprep.subr.bf16.mxu0 0
    %2798 = vmatpush1.bf16.msra.mxu0 %v2753
    %2799 = vmatprep.subr.bf16.mxu0 0
    %2800 = vmatpush1.bf16.msra.mxu0 %v2754
    %2801 = vmatprep.subr.bf16.mxu0 0
    %2802 = vmatpush1.bf16.msra.mxu0 %v2755
    %2803 = vmatprep.subr.bf16.mxu0 0
    %2804 = vmatpush1.bf16.msra.mxu0 %v2756
    %2805 = vmatprep.subr.bf16.mxu0 0
    %2806 = vmatpush1.bf16.msra.mxu0 %v2757
    %2807 = vmatprep.subr.bf16.mxu0 0
    %2808 = vmatpush1.bf16.msra.mxu0 %v2758
    %2809 = vmatprep.subr.bf16.mxu0 0
    %2810 = vmatpush1.bf16.msra.mxu0 %v2759
    %2811 = vmatprep.subr.bf16.mxu0 0
    %2812 = vmatpush1.bf16.msra.mxu0 %v2760
    %2813 = vmatprep.subr.bf16.mxu0 0
    %2814 = vmatpush1.bf16.msra.mxu0 %v2761
    %2815 = vmatprep.subr.bf16.mxu0 0
    %2816 = vmatpush1.bf16.msra.mxu0 %v2762
    %2817 = vmatprep.subr.bf16.mxu0 0
    %2818 = vmatpush1.bf16.msra.mxu0 %v2763
    %2819 = vmatprep.subr.bf16.mxu0 0
    %2820 = vmatpush1.bf16.msra.mxu0 %v2764
    %2821 = vmatprep.subr.bf16.mxu0 0
    %2822 = vmatpush1.bf16.msra.mxu0 %v2765
    %2823 = vmatprep.subr.bf16.mxu0 0
    %2824 = vmatpush1.bf16.msra.mxu0 %v2766
    %2825 = vmatprep.subr.bf16.mxu0 0
    %2826 = vmatpush1.bf16.msra.mxu0 %v2767
    %2827 = vmatprep.subr.bf16.mxu0 0
    %2828 = vmatpush1.bf16.msra.mxu0 %v2768
    %2829 = vmatprep.mubr.bf16.mxu0 %v2668
    %2830 = vmatmul.mubr.bf16.gmra.mrb[0].mxu0 %v2667
    %v2831 = vpop.f32.mrb[0].mxu0
    %v2832 = vadd.f32 %v2675, %v2831
    %v2833 = vpop.f32.mrb[0].mxu0
    %v2834 = vpop.f32.mrb[0].mxu0
    %v2835 = vpop.f32.mrb[0].mxu0
    %2836 = vdwg.mxu0
    %2837 = vmatprep.subr.bf16.mxu0 0
    %2838 = vmatpush1.bf16.msra.mxu0 %v2769
    %2839 = vmatprep.subr.bf16.mxu0 0
    %2840 = vmatpush1.bf16.msra.mxu0 %v2770
    %2841 = vmatprep.subr.bf16.mxu0 0
    %2842 = vmatpush1.bf16.msra.mxu0 %v2795
    %2843 = vmatprep.subr.bf16.mxu0 0
    %2844 = vmatpush1.bf16.msra.mxu0 0
    %2845 = vmatprep.subr.bf16.mxu0 0
    %2846 = vmatpush1.bf16.msra.mxu0 0
    %2847 = vmatprep.subr.bf16.mxu0 0
    %2848 = vmatpush1.bf16.msra.mxu0 0
    %2849 = vmatprep.subr.bf16.mxu0 0
    %2850 = vmatpush1.bf16.msra.mxu0 0
    %2851 = vmatprep.subr.bf16.mxu0 0
    %2852 = vmatpush1.bf16.msra.mxu0 0
    %2853 = vmatprep.subr.bf16.mxu0 0
    %2854 = vmatpush1.bf16.msra.mxu0 0
    %2855 = vmatprep.subr.bf16.mxu0 0
    %2856 = vmatpush1.bf16.msra.mxu0 0
    %2857 = vmatprep.subr.bf16.mxu0 0
    %2858 = vmatpush1.bf16.msra.mxu0 0
    %2859 = vmatprep.subr.bf16.mxu0 0
    %2860 = vmatpush1.bf16.msra.mxu0 0
    %2861 = vmatprep.subr.bf16.mxu0 0
    %2862 = vmatpush1.bf16.msra.mxu0 0
    %2863 = vmatprep.subr.bf16.mxu0 0
    %2864 = vmatpush1.bf16.msra.mxu0 0
    %2865 = vmatprep.subr.bf16.mxu0 0
    %2866 = vmatpush1.bf16.msra.mxu0 0
    %2867 = vmatprep.subr.bf16.mxu0 0
    %2868 = vmatpush1.bf16.msra.mxu0 0
    %2869 = vmatprep.mubr.bf16.mxu0 0
    %2870 = vmatmul.mubr.bf16.gmra.mrb[0].mxu0 %v2792
    %v2871 = vpop.f32.mrb[0].mxu0
    %v2872 = vadd.f32 %v2832, %v2871
    %v2873 = vpop.f32.mrb[0].mxu0
    %v2874 = vpop.f32.mrb[0].mxu0
    %v2875 = vpop.f32.mrb[0].mxu0
    %2876 = vdwg.mxu0
    %v2877 = vtanh.pop %v2872
    %v2878 = vld [vmem:[#allocation17] sm:$0x7]
    %v2880 = vlaneseq
    %v2881 = vshrl.u32 %v2880, 7
    %v2882 = vsub.s32 0, %v2881
    %v2883 = vrot.slane %v2878, %v2882
    %v2884 = vlaneseq
    %v2885 = vshrl.u32 %v2884, 7
    %v2886 = vsub.s32 1, %v2885
    %v2887 = vrot.slane %v2878, %v2886
    %v2888 = vlaneseq
    %v2889 = vshrl.u32 %v2888, 7
    %v2890 = vsub.s32 2, %v2889
    %v2891 = vrot.slane %v2878, %v2890
    %v2895 = vmul.f32 %v2626, %v2883
    %v2896 = vmul.f32 %v2627, %v2887
    %v2897 = vmul.f32 %v2628, %v2891
    %v2898 = vsel %vm607, %v2895, 0.0
    %v2899 = vsel %vm607, %v2896, 0.0
    %v2900 = vadd.f32 %v2898, %v2899
    %vm2901 = vcmask 353280
    %v2902 = vsel %vm2901, %v2897, 0.0
    %v2903 = vadd.f32 %v2900, %v2902
    %2904 = vadd.xlane.f32.xlu0 %v2903
    %v2905 = vpop.xlane.xlu0 %2904
    %v2906 = vld [vmem:[#allocation2] sm:$0x1]
    %v2908 = vlaneseq
    %v2909 = vshrl.u32 %v2908, 7
    %v2910 = vsub.s32 0, %v2909
    %v2911 = vrot.slane %v2906, %v2910
    %v2913 = vadd.f32 %v2905, %v2911
    %v2914 = vtanh.pop %v2913
    %v2915 = vld [vmem:[%s3] sm:$0x1]
    %v2916 = vlog2.pop %v2915
    %v2917 = vmul.f32 %v2916, 0.6931472
    %vm2918 = vcmask 57344
    %v2919 = vsel %vm2918, %v2917, 0.0
    %2920 = vadd.xlane.f32.xlu0 %v2919
    %v2921 = vpop.xlane.xlu0 %2920
    %v2922 = vsub.f32 %v671, %v2877
    %v2923 = vmul.f32 %v2922, %v2922
    %v2925 = vlaneseq
    %v2926 = vshrl.u32 %v2925, 7
    %v2927 = vsub.s32 0, %v2926
    %v2928 = vrot.slane %v2915, %v2927
    %v2930 = vrcp.pop %v2928
    %v2931 = vmul.f32 %v2923, %v2930
    %vm2932 = vcmask 58368
    %v2933 = vsel %vm2932, %v2931, 0.0
    %2934 = vadd.xlane.f32.xlu0 %v2933
    %v2935 = vpop.xlane.xlu0 %2934
    %v2936 = vlaneseq
    %v2937 = vshrl.u32 %v2936, 7
    %v2938 = vsub.s32 0, %v2937
    %v2939 = vrot.slane %v2921, %v2938
    %v2940 = vadd.f32 %v2935, %v2939
    %v2941 = vadd.f32 %v2940, 14.703016
    %v2942 = vmul.f32 %v2941, -0.5
    %v2943 = vmul.f32 %v2921, 0.5
    %v2944 = vadd.f32 %v2943, 11.351508
    %v2945 = vlaneseq
    %v2946 = vand.u32 %v2945, 127
    %vm2947 = vcmp.eq.s32.totalorder %v2946, 8
    %2949 = vset.pattern.permute.xlu0 0
    %2950 = vperm.xlu0 %2949, %v2914
    %v2951 = vpop.permute.xlu0 %2950
    %v2953 = vsel %vm2947, %v2951, 0.0
    %v2954 = vadd.f32 %v2877, %v2953
    %vm2955 = vcmp.eq.s32.totalorder %v2946, 9
    %v2956 = vsel %vm2955, %v2942, 0.0
    %v2957 = vadd.f32 %v2954, %v2956
    %vm2958 = vcmp.eq.s32.totalorder %v2946, 10
    %v2959 = vlaneseq
    %v2960 = vshrl.u32 %v2959, 7
    %v2961 = vsub.s32 0, %v2960
    %v2962 = vrot.slane %v2944, %v2961
    %v2963 = vsel %vm2958, %v2962, 0.0
    %v2964 = vadd.f32 %v2957, %v2963
    %2965 = vst [vmem:[%s20] sm:$0x3] %v2964
    // Predicated region
    $region122: #{actor_critic_evaluate.1} parent=1 // pred_check
      _
    $region123: #{actor_critic_evaluate.1} parent=1 // pred_check_branch
      %2967 = sbr.rel (0) target = $region125
    $region124: #{actor_critic_evaluate.1} parent=1 // pred_region
      _
    $region125: #{actor_critic_evaluate.1} parent=1 // pred_fallthru
      _
    // Predicated region
    $region126: #{actor_critic_evaluate.1} parent=1 // pred_check
      _
    $region127: #{actor_critic_evaluate.1} parent=1 // pred_check_branch
      %2969 = sbr.rel (0) target = $region129
    $region128: #{actor_critic_evaluate.1} parent=1 // pred_region
      _
    $region129: #{actor_critic_evaluate.1} parent=1 // pred_fallthru
      _
    %2970 = vsyncpa [#allocation4], 1
    %2971 = vsyncpa [#allocation6], 1
    %2972 = vsyncpa [#allocation9], 1
    %2973 = vsyncpa [#allocation12], 1
    %2974 = vsyncpa [#allocation15], 1
    %2975 = vsyncpa [#allocation18], 1

</llo_original>
